<compile_context>
chip_gen: v7x
topology: tpu7x:2x2x1
jax: 0.10.0
libtpu: 0.0.40
codegen_flags: <defaults>
</compile_context>

<pallas_src>
import functools

import jax
import jax.numpy as jnp
from jax.experimental import pallas as pl
from jax.experimental.pallas import tpu as pltpu

_VMEM_LIMIT = 64 * 1024 * 1024  # explicit scoped-VMEM limit; valid on v5e/v6e/v7x


def _round_up(x, m):
    return ((x + m - 1) // m) * m


def _largest_divisor_leq(n, target):
    t = max(1, min(n, target))
    while n % t:
        t -= 1
    return t


# ---------------------------------------------------------------------------
# Tiled matmul + bias:  [M, K] @ [K, N] + b[1, N] -> [M, N]  (f32 accumulate).
# Used for the final fc projection (the LSTM input projection is fused into
# the recurrence kernel below).
# ---------------------------------------------------------------------------
def _mm_bias_kernel(x_ref, w_ref, b_ref, o_ref):
    # The output block is resident across the k axis (its index map ignores k),
    # so accumulate directly into the f32 output block; initialize it with the
    # bias on the first k step.  No separate accumulator scratch needed.
    @pl.when(pl.program_id(2) == 0)
    def _():
        o_ref[...] = jnp.broadcast_to(b_ref[...], o_ref.shape)

    o_ref[...] += jnp.dot(x_ref[...], w_ref[...],
                          preferred_element_type=jnp.float32)


def matmul_bias(x, w, b, *, tm=512, tn=1024, tk=512,
                compute_dtype=jnp.bfloat16):
    """x:[M,K] @ w:[K,N] + b:[1,N] -> [M,N] f32.

    Operands are cast to `compute_dtype` (bf16 by default) for the MXU; the
    accumulation stays f32.  Non-divisible dims are zero-padded up to the tile
    (instead of the old full-dim fallback, which would request a K x vocab
    weight tile for a real vocab) and the result is sliced back.
    """
    M, K = x.shape
    N = w.shape[1]
    tm_ = min(tm, _round_up(M, 8))
    tk_ = min(tk, _round_up(K, 128))
    tn_ = min(tn, _round_up(N, 128))
    Mp, Kp, Np = _round_up(M, tm_), _round_up(K, tk_), _round_up(N, tn_)

    xp = x.astype(compute_dtype)
    wp = w.astype(compute_dtype)
    bp = b.astype(jnp.float32)
    if (Mp, Kp) != (M, K):
        xp = jnp.pad(xp, ((0, Mp - M), (0, Kp - K)))
    if (Kp, Np) != (K, N):
        wp = jnp.pad(wp, ((0, Kp - K), (0, Np - N)))
    if Np != N:
        bp = jnp.pad(bp, ((0, 0), (0, Np - N)))

    out = pl.pallas_call(
        _mm_bias_kernel,
        out_shape=jax.ShapeDtypeStruct((Mp, Np), jnp.float32),
        grid_spec=pltpu.PrefetchScalarGridSpec(
            num_scalar_prefetch=0,
            grid=(Mp // tm_, Np // tn_, Kp // tk_),
            in_specs=[
                pl.BlockSpec((tm_, tk_), lambda i, j, k: (i, k)),
                pl.BlockSpec((tk_, tn_), lambda i, j, k: (k, j)),
                pl.BlockSpec((1, tn_), lambda i, j, k: (0, j)),
            ],
            out_specs=pl.BlockSpec((tm_, tn_), lambda i, j, k: (i, j)),
        ),
        compiler_params=pltpu.CompilerParams(
            dimension_semantics=("parallel", "parallel", "arbitrary"),
            vmem_limit_bytes=_VMEM_LIMIT),
    )(xp, wp, bp)

    if (Mp, Np) != (M, N):
        out = out[:M, :N]
    return out


# ---------------------------------------------------------------------------
# Fused LSTM layer kernel: per time chunk,
#   phase 1: gates_x = x @ W_ih + b  into VMEM scratch (TC independent matmuls,
#            never written to HBM),
#   phase 2: serial recurrence, one h @ W_hh MXU push + gate math per step.
# h/c persist in VMEM scratch across time chunks of a batch block.
# ---------------------------------------------------------------------------
def _lstm_layer_kernel(x_ref, w_ih_ref, b_ref, w_hh_ref, h0_ref, c0_ref,
                       y_ref, hn_ref, cn_ref, gx_sc, h_sc, c_sc, *, unroll):
    tblk = pl.program_id(1)  # time-chunk index (serial); axis 0 is the batch block

    @pl.when(tblk == 0)
    def _():
        h_sc[...] = h0_ref[...]
        c_sc[...] = c0_ref[...]

    TC = gx_sc.shape[0]
    H = h_sc.shape[1]

    w_ih = w_ih_ref[...]          # already compute dtype (bf16 by default)
    w_hh = w_hh_ref[...]
    bias = b_ref[...]             # f32 [1, 4H]

    # Phase 1: input projection for the whole chunk (independent of the
    # recurrence -> the scheduler can pipeline these MXU pushes freely).
    def proj(t, carry):
        gx_sc[t] = jnp.dot(x_ref[t], w_ih,
                           preferred_element_type=jnp.float32) + bias
        return carry

    jax.lax.fori_loop(0, TC, proj, 0, unroll=unroll)

    # Phase 2: serial recurrence.  bf16 MXU operands, f32 accumulate; gate
    # nonlinearities and the c/h state stay f32.
    def step(t, carry):
        gates = gx_sc[t] + jnp.dot(h_sc[...].astype(w_hh.dtype), w_hh,
                                   preferred_element_type=jnp.float32)
        # TODO(synk): for H not a multiple of 128 these lane slices lower to
        # masked work; a gate-major [..., 4, H] layout would avoid it (H=512
        # production config is already lane-aligned).
        i_g = jax.nn.sigmoid(gates[:, 0 * H:1 * H])
        f_g = jax.nn.sigmoid(gates[:, 1 * H:2 * H])
        g_g = jnp.tanh(gates[:, 2 * H:3 * H])
        o_g = jax.nn.sigmoid(gates[:, 3 * H:4 * H])
        c_new = f_g * c_sc[...] + i_g * g_g
        h_new = o_g * jnp.tanh(c_new)
        c_sc[...] = c_new
        h_sc[...] = h_new
        y_ref[t] = h_new.astype(y_ref.dtype)
        return carry

    jax.lax.fori_loop(0, TC, step, 0, unroll=unroll)

    # Final-state stores only on the last time chunk of this batch block.
    @pl.when(tblk == pl.num_programs(1) - 1)
    def _():
        hn_ref[...] = h_sc[...]
        cn_ref[...] = c_sc[...]


def lstm_layer(x_tm, w_ih, w_hh, b, h0, c0, *, time_chunk=8, batch_block=None,
               compute_dtype=jnp.bfloat16, unroll=True):
    """One LSTM layer over a time-major sequence.

    x_tm: [T, B, E]; w_ih: [E, 4H]; w_hh: [H, 4H]; b: [1, 4H]; h0/c0: [B, H] f32.
    Returns y [T, B, H] in compute_dtype and (h_n, c_n) in f32.
    On v7x set batch_block=B//2 (multiple of 8) to spread the recurrence across
    both TensorCores; the default (full batch) is optimal on v5e/v6e.
    """
    T, B, E = x_tm.shape
    H = w_hh.shape[0]
    G = 4 * H

    TC = _largest_divisor_leq(T, time_chunk)
    BT = B if batch_block is None else batch_block
    if B % BT != 0 or not (BT == B or BT % 8 == 0):
        raise ValueError("batch_block must divide B and be a multiple of 8 (or == B)")
    grid = (B // BT, T // TC)

    kernel = functools.partial(_lstm_layer_kernel, unroll=unroll)

    return pl.pallas_call(
        kernel,
        out_shape=(
            jax.ShapeDtypeStruct((T, B, H), compute_dtype),  # y (feeds next layer / fc)
            jax.ShapeDtypeStruct((B, H), jnp.float32),       # h_n
            jax.ShapeDtypeStruct((B, H), jnp.float32),       # c_n
        ),
        grid_spec=pltpu.PrefetchScalarGridSpec(
            num_scalar_prefetch=0,
            grid=grid,
            in_specs=[
                pl.BlockSpec((TC, BT, E), lambda bb, tt: (tt, bb, 0)),
                pl.BlockSpec((E, G), lambda bb, tt: (0, 0)),
                pl.BlockSpec((1, G), lambda bb, tt: (0, 0)),
                pl.BlockSpec((H, G), lambda bb, tt: (0, 0)),
                pl.BlockSpec((BT, H), lambda bb, tt: (bb, 0)),
                pl.BlockSpec((BT, H), lambda bb, tt: (bb, 0)),
            ],
            out_specs=[
                pl.BlockSpec((TC, BT, H), lambda bb, tt: (tt, bb, 0)),
                pl.BlockSpec((BT, H), lambda bb, tt: (bb, 0)),
                pl.BlockSpec((BT, H), lambda bb, tt: (bb, 0)),
            ],
            scratch_shapes=[
                pltpu.VMEM((TC, BT, G), jnp.float32),  # gates_x chunk (VMEM-only)
                pltpu.VMEM((BT, H), jnp.float32),      # h state
                pltpu.VMEM((BT, H), jnp.float32),      # c state
            ],
        ),
        compiler_params=pltpu.CompilerParams(
            dimension_semantics=("parallel", "arbitrary"),
            vmem_limit_bytes=_VMEM_LIMIT),
    )(x_tm.astype(compute_dtype), w_ih.astype(compute_dtype),
      b.astype(jnp.float32), w_hh.astype(compute_dtype),
      h0.astype(jnp.float32), c0.astype(jnp.float32))


# ---------------------------------------------------------------------------
# Full RNN forward.
# ---------------------------------------------------------------------------
def rnn_forward(params, x_tokens, h=None, *, compute_dtype=jnp.bfloat16,
                time_chunk=8, batch_block=None):
    # Gather embeddings directly in time-major order [T, B, E] (no transpose of
    # activations on the way in).
    emb_tm = jnp.take(params["embedding"], x_tokens.T, axis=0)
    T, B, _ = emb_tm.shape
    layers = params["lstm"]
    L = len(layers)
    H = layers[0]["w_hh"].shape[0]

    if h is None:
        h0 = jnp.zeros((L, B, H), jnp.float32)
        c0 = jnp.zeros((L, B, H), jnp.float32)
    else:
        h0, c0 = h

    x_seq = emb_tm                                             # [T, B, E_in]
    h_list, c_list = [], []
    for l in range(L):
        p = layers[l]
        x_seq, hn, cn = lstm_layer(x_seq, p["w_ih"], p["w_hh"], p["b"],
                                   h0[l], c0[l],
                                   time_chunk=time_chunk,
                                   batch_block=batch_block,
                                   compute_dtype=compute_dtype)
        h_list.append(hn)
        c_list.append(cn)

    out = jnp.transpose(x_seq, (1, 0, 2))                      # [B, T, H] (pre-fc, smaller than logits)
    logits = matmul_bias(out.reshape(B * T, H), params["fc_w"], params["fc_b"],
                         compute_dtype=compute_dtype)
    logits = logits.reshape(B, T, -1)
    return logits, (jnp.stack(h_list, axis=0), jnp.stack(c_list, axis=0))


# ---------------------------------------------------------------------------
# Pure-JAX reference (same weight layout) for correctness check.
# ---------------------------------------------------------------------------
def rnn_forward_ref(params, x_tokens):
    emb = jnp.take(params["embedding"], x_tokens, axis=0)      # [B, T, E]
    B, T, _ = emb.shape
    layers = params["lstm"]
    L = len(layers)
    H = layers[0]["w_hh"].shape[0]

    x = emb
    h_fin, c_fin = [], []
    for l in range(L):
        p = layers[l]
        hh = jnp.zeros((B, H), jnp.float32)
        cc = jnp.zeros((B, H), jnp.float32)
        ys = []
        for t in range(T):
            gates = x[:, t, :] @ p["w_ih"] + hh @ p["w_hh"] + p["b"]
            i_g = jax.nn.sigmoid(gates[:, 0 * H:1 * H])
            f_g = jax.nn.sigmoid(gates[:, 1 * H:2 * H])
            g_g = jnp.tanh(gates[:, 2 * H:3 * H])
            o_g = jax.nn.sigmoid(gates[:, 3 * H:4 * H])
            cc = f_g * cc + i_g * g_g
            hh = o_g * jnp.tanh(cc)
            ys.append(hh)
        x = jnp.stack(ys, axis=1)                              # [B, T, H]
        h_fin.append(hh)
        c_fin.append(cc)
    logits = x @ params["fc_w"] + params["fc_b"]
    return logits, (jnp.stack(h_fin), jnp.stack(c_fin))


# ---------------------------------------------------------------------------
# Deterministic parameter construction (shapes follow the nn.Module __init__).
# ---------------------------------------------------------------------------
def init_params(key, vocab_size, embedding_dim, hidden_dim, num_layers):
    keys = jax.random.split(key, 2 + 3 * num_layers + 2)
    k = iter(keys)
    scale = 1.0 / jnp.sqrt(hidden_dim)
    params = {
        "embedding": jax.random.normal(next(k), (vocab_size, embedding_dim),
                                       jnp.float32) * 0.1,
        "lstm": [],
        "fc_w": jax.random.uniform(next(k), (hidden_dim, vocab_size),
                                   jnp.float32, -scale, scale),
        "fc_b": jnp.zeros((1, vocab_size), jnp.float32),
    }
    for l in range(num_layers):
        e_in = embedding_dim if l == 0 else hidden_dim
        w_ih = jax.random.uniform(next(k), (e_in, 4 * hidden_dim),
                                  jnp.float32, -scale, scale)
        w_hh = jax.random.uniform(next(k), (hidden_dim, 4 * hidden_dim),
                                  jnp.float32, -scale, scale)
        b = jax.random.uniform(next(k), (1, 4 * hidden_dim),
                               jnp.float32, -scale, scale)
        params["lstm"].append({"w_ih": w_ih, "w_hh": w_hh, "b": b})
    return params


if __name__ == "__main__":
    # Small shapes consistent with the module: vocab=32, E=16, H=32, 3 layers.
    VOCAB, E, H, L = 32, 16, 32, 3
    B, T = 2, 8

    key = jax.random.PRNGKey(0)
    pkey, xkey = jax.random.split(key)
    params = init_params(pkey, VOCAB, E, H, L)
    x_tokens = jax.random.randint(xkey, (B, T), 0, VOCAB, dtype=jnp.int32)

    # Default path: bf16 MXU operands, f32 accumulation / gate math / state.
    logits, (h_n, c_n) = rnn_forward(params, x_tokens)
    jax.block_until_ready(logits)
    jax.block_until_ready(h_n)
    jax.block_until_ready(c_n)

    ref_logits, (ref_h, ref_c) = rnn_forward_ref(params, x_tokens)
    assert logits.shape == (B, T, VOCAB)
    assert h_n.shape == (L, B, H) and c_n.shape == (L, B, H)
    # Loosened tolerance because MXU operands are bf16 (accumulation stays f32).
    assert jnp.allclose(logits, ref_logits, atol=5e-2, rtol=5e-2)
    assert jnp.allclose(h_n, ref_h, atol=5e-2, rtol=5e-2)
    assert jnp.allclose(c_n, ref_c, atol=5e-2, rtol=5e-2)

    # f32-compute path: tight numerical parity with the reference.
    logits32, (h32, c32) = rnn_forward(params, x_tokens,
                                       compute_dtype=jnp.float32)
    jax.block_until_ready(logits32)
    assert jnp.allclose(logits32, ref_logits, atol=1e-4, rtol=1e-4)
    assert jnp.allclose(h32, ref_h, atol=1e-4, rtol=1e-4)
    assert jnp.allclose(c32, ref_c, atol=1e-4, rtol=1e-4)

    print("KERNEL_OK")
</pallas_src>

<mosaic_0001>
module attributes {stable_mosaic.version = 11 : i64} {
  func.func @_lstm_layer_kernel(%arg0: i32, %arg1: i32, %arg2: memref<8x2x16xbf16, #tpu.memory_space<vmem>>, %arg3: memref<16x128xbf16, #tpu.memory_space<vmem>>, %arg4: memref<1x128xf32, #tpu.memory_space<vmem>>, %arg5: memref<32x128xbf16, #tpu.memory_space<vmem>>, %arg6: memref<2x32xf32, #tpu.memory_space<vmem>>, %arg7: memref<2x32xf32, #tpu.memory_space<vmem>>, %arg8: memref<8x2x32xbf16, #tpu.memory_space<vmem>>, %arg9: memref<2x32xf32, #tpu.memory_space<vmem>>, %arg10: memref<2x32xf32, #tpu.memory_space<vmem>>, %arg11: memref<8x2x128xf32, #tpu.memory_space<vmem>>, %arg12: memref<2x32xf32, #tpu.memory_space<vmem>>, %arg13: memref<2x32xf32, #tpu.memory_space<vmem>>) attributes {dimension_semantics = [#tpu.dimension_semantics<parallel>, #tpu.dimension_semantics<arbitrary>], iteration_bounds = array<i64: 1, 1>, scalar_prefetch = 0 : i64, scratch_operands = 3 : i64, tpu.core_type = #tpu.core_type<tc>, window_params = [{transform_indices = @transform_0, window_bounds = array<i64: 8, 2, 16>}, {pipeline_mode = #tpu.pipeline_mode<synchronous>, transform_indices = @transform_1, window_bounds = array<i64: 16, 128>}, {pipeline_mode = #tpu.pipeline_mode<synchronous>, transform_indices = @transform_2, window_bounds = array<i64: 1, 128>}, {pipeline_mode = #tpu.pipeline_mode<synchronous>, transform_indices = @transform_3, window_bounds = array<i64: 32, 128>}, {transform_indices = @transform_4, window_bounds = array<i64: 2, 32>}, {transform_indices = @transform_5, window_bounds = array<i64: 2, 32>}, {transform_indices = @transform_6, window_bounds = array<i64: 8, 2, 32>}, {transform_indices = @transform_7, window_bounds = array<i64: 2, 32>}, {transform_indices = @transform_8, window_bounds = array<i64: 2, 32>}]} {
    %c0_i32 = arith.constant 0 : i32
    %0 = arith.cmpi eq, %arg1, %c0_i32 : i32
    %1 = arith.extui %0 : i1 to i32
    %c0_i32_0 = arith.constant 0 : i32
    %2 = arith.cmpi ne, %1, %c0_i32_0 : i32
    scf.if %2 {
      %c0_185 = arith.constant 0 : index
      %c0_186 = arith.constant 0 : index
      %409 = vector.load %arg6[%c0_185, %c0_186] : memref<2x32xf32, #tpu.memory_space<vmem>>, vector<2x32xf32>
      %c0_187 = arith.constant 0 : index
      %c0_188 = arith.constant 0 : index
      %410 = vector.load %arg12[%c0_187, %c0_188] : memref<2x32xf32, #tpu.memory_space<vmem>>, vector<2x32xf32>
      tpu.vector_store %arg12[%c0_187, %c0_188], %409 {strides = array<i32>} : memref<2x32xf32, #tpu.memory_space<vmem>>, vector<2x32xf32>,
      %c0_189 = arith.constant 0 : index
      %c0_190 = arith.constant 0 : index
      %411 = vector.load %arg7[%c0_189, %c0_190] : memref<2x32xf32, #tpu.memory_space<vmem>>, vector<2x32xf32>
      %c0_191 = arith.constant 0 : index
      %c0_192 = arith.constant 0 : index
      %412 = vector.load %arg13[%c0_191, %c0_192] : memref<2x32xf32, #tpu.memory_space<vmem>>, vector<2x32xf32>
      tpu.vector_store %arg13[%c0_191, %c0_192], %411 {strides = array<i32>} : memref<2x32xf32, #tpu.memory_space<vmem>>, vector<2x32xf32>,
    } else {
    }
    %c0 = arith.constant 0 : index
    %c0_1 = arith.constant 0 : index
    %3 = vector.load %arg3[%c0, %c0_1] : memref<16x128xbf16, #tpu.memory_space<vmem>>, vector<16x128xbf16>
    %c0_2 = arith.constant 0 : index
    %c0_3 = arith.constant 0 : index
    %4 = vector.load %arg5[%c0_2, %c0_3] : memref<32x128xbf16, #tpu.memory_space<vmem>>, vector<32x128xbf16>
    %c0_4 = arith.constant 0 : index
    %c0_5 = arith.constant 0 : index
    %5 = vector.load %arg4[%c0_4, %c0_5] : memref<1x128xf32, #tpu.memory_space<vmem>>, vector<1x128xf32>
    %c0_i32_6 = arith.constant 0 : i32
    %6 = arith.index_cast %c0_i32_6 : i32 to index
    %c0_7 = arith.constant 0 : index
    %c0_8 = arith.constant 0 : index
    %7 = vector.load %arg2[%6, %c0_7, %c0_8] : memref<8x2x16xbf16, #tpu.memory_space<vmem>>, vector<1x2x16xbf16>
    %8 = vector.shape_cast %7 : vector<1x2x16xbf16> to vector<2x16xbf16>
    %cst = arith.constant dense<0.000000e+00> : vector<2x128xf32>
    %9 = tpu.matmul %8, %3, %cst {dimension_numbers = #tpu.dot_dimension_numbers<[1], [0], [0], [1], [0, 0, 1, 1], [], []>} : vector<2x16xbf16>, vector<16x128xbf16>, vector<2x128xf32> -> vector<2x128xf32>
    %10 = vector.broadcast %5 : vector<1x128xf32> to vector<2x128xf32>
    %11 = arith.addf %9, %10 : vector<2x128xf32>
    %12 = arith.index_cast %c0_i32_6 : i32 to index
    %c0_9 = arith.constant 0 : index
    %c0_10 = arith.constant 0 : index
    %13 = vector.load %arg11[%12, %c0_9, %c0_10] : memref<8x2x128xf32, #tpu.memory_space<vmem>>, vector<1x2x128xf32>
    %14 = vector.shape_cast %13 : vector<1x2x128xf32> to vector<2x128xf32>
    %15 = vector.shape_cast %11 : vector<2x128xf32> to vector<1x2x128xf32>
    tpu.vector_store %arg11[%12, %c0_9, %c0_10], %15 {strides = array<i32>} : memref<8x2x128xf32, #tpu.memory_space<vmem>>, vector<1x2x128xf32>,
    %c1_i32 = arith.constant 1 : i32
    %16 = arith.index_cast %c1_i32 : i32 to index
    %c0_11 = arith.constant 0 : index
    %c0_12 = arith.constant 0 : index
    %17 = vector.load %arg2[%16, %c0_11, %c0_12] : memref<8x2x16xbf16, #tpu.memory_space<vmem>>, vector<1x2x16xbf16>
    %18 = vector.shape_cast %17 : vector<1x2x16xbf16> to vector<2x16xbf16>
    %cst_13 = arith.constant dense<0.000000e+00> : vector<2x128xf32>
    %19 = tpu.matmul %18, %3, %cst_13 {dimension_numbers = #tpu.dot_dimension_numbers<[1], [0], [0], [1], [0, 0, 1, 1], [], []>} : vector<2x16xbf16>, vector<16x128xbf16>, vector<2x128xf32> -> vector<2x128xf32>
    %20 = vector.broadcast %5 : vector<1x128xf32> to vector<2x128xf32>
    %21 = arith.addf %19, %20 : vector<2x128xf32>
    %22 = arith.index_cast %c1_i32 : i32 to index
    %c0_14 = arith.constant 0 : index
    %c0_15 = arith.constant 0 : index
    %23 = vector.load %arg11[%22, %c0_14, %c0_15] : memref<8x2x128xf32, #tpu.memory_space<vmem>>, vector<1x2x128xf32>
    %24 = vector.shape_cast %23 : vector<1x2x128xf32> to vector<2x128xf32>
    %25 = vector.shape_cast %21 : vector<2x128xf32> to vector<1x2x128xf32>
    tpu.vector_store %arg11[%22, %c0_14, %c0_15], %25 {strides = array<i32>} : memref<8x2x128xf32, #tpu.memory_space<vmem>>, vector<1x2x128xf32>,
    %c2_i32 = arith.constant 2 : i32
    %26 = arith.index_cast %c2_i32 : i32 to index
    %c0_16 = arith.constant 0 : index
    %c0_17 = arith.constant 0 : index
    %27 = vector.load %arg2[%26, %c0_16, %c0_17] : memref<8x2x16xbf16, #tpu.memory_space<vmem>>, vector<1x2x16xbf16>
    %28 = vector.shape_cast %27 : vector<1x2x16xbf16> to vector<2x16xbf16>
    %cst_18 = arith.constant dense<0.000000e+00> : vector<2x128xf32>
    %29 = tpu.matmul %28, %3, %cst_18 {dimension_numbers = #tpu.dot_dimension_numbers<[1], [0], [0], [1], [0, 0, 1, 1], [], []>} : vector<2x16xbf16>, vector<16x128xbf16>, vector<2x128xf32> -> vector<2x128xf32>
    %30 = vector.broadcast %5 : vector<1x128xf32> to vector<2x128xf32>
    %31 = arith.addf %29, %30 : vector<2x128xf32>
    %32 = arith.index_cast %c2_i32 : i32 to index
    %c0_19 = arith.constant 0 : index
    %c0_20 = arith.constant 0 : index
    %33 = vector.load %arg11[%32, %c0_19, %c0_20] : memref<8x2x128xf32, #tpu.memory_space<vmem>>, vector<1x2x128xf32>
    %34 = vector.shape_cast %33 : vector<1x2x128xf32> to vector<2x128xf32>
    %35 = vector.shape_cast %31 : vector<2x128xf32> to vector<1x2x128xf32>
    tpu.vector_store %arg11[%32, %c0_19, %c0_20], %35 {strides = array<i32>} : memref<8x2x128xf32, #tpu.memory_space<vmem>>, vector<1x2x128xf32>,
    %c3_i32 = arith.constant 3 : i32
    %36 = arith.index_cast %c3_i32 : i32 to index
    %c0_21 = arith.constant 0 : index
    %c0_22 = arith.constant 0 : index
    %37 = vector.load %arg2[%36, %c0_21, %c0_22] : memref<8x2x16xbf16, #tpu.memory_space<vmem>>, vector<1x2x16xbf16>
    %38 = vector.shape_cast %37 : vector<1x2x16xbf16> to vector<2x16xbf16>
    %cst_23 = arith.constant dense<0.000000e+00> : vector<2x128xf32>
    %39 = tpu.matmul %38, %3, %cst_23 {dimension_numbers = #tpu.dot_dimension_numbers<[1], [0], [0], [1], [0, 0, 1, 1], [], []>} : vector<2x16xbf16>, vector<16x128xbf16>, vector<2x128xf32> -> vector<2x128xf32>
    %40 = vector.broadcast %5 : vector<1x128xf32> to vector<2x128xf32>
    %41 = arith.addf %39, %40 : vector<2x128xf32>
    %42 = arith.index_cast %c3_i32 : i32 to index
    %c0_24 = arith.constant 0 : index
    %c0_25 = arith.constant 0 : index
    %43 = vector.load %arg11[%42, %c0_24, %c0_25] : memref<8x2x128xf32, #tpu.memory_space<vmem>>, vector<1x2x128xf32>
    %44 = vector.shape_cast %43 : vector<1x2x128xf32> to vector<2x128xf32>
    %45 = vector.shape_cast %41 : vector<2x128xf32> to vector<1x2x128xf32>
    tpu.vector_store %arg11[%42, %c0_24, %c0_25], %45 {strides = array<i32>} : memref<8x2x128xf32, #tpu.memory_space<vmem>>, vector<1x2x128xf32>,
    %c4_i32 = arith.constant 4 : i32
    %46 = arith.index_cast %c4_i32 : i32 to index
    %c0_26 = arith.constant 0 : index
    %c0_27 = arith.constant 0 : index
    %47 = vector.load %arg2[%46, %c0_26, %c0_27] : memref<8x2x16xbf16, #tpu.memory_space<vmem>>, vector<1x2x16xbf16>
    %48 = vector.shape_cast %47 : vector<1x2x16xbf16> to vector<2x16xbf16>
    %cst_28 = arith.constant dense<0.000000e+00> : vector<2x128xf32>
    %49 = tpu.matmul %48, %3, %cst_28 {dimension_numbers = #tpu.dot_dimension_numbers<[1], [0], [0], [1], [0, 0, 1, 1], [], []>} : vector<2x16xbf16>, vector<16x128xbf16>, vector<2x128xf32> -> vector<2x128xf32>
    %50 = vector.broadcast %5 : vector<1x128xf32> to vector<2x128xf32>
    %51 = arith.addf %49, %50 : vector<2x128xf32>
    %52 = arith.index_cast %c4_i32 : i32 to index
    %c0_29 = arith.constant 0 : index
    %c0_30 = arith.constant 0 : index
    %53 = vector.load %arg11[%52, %c0_29, %c0_30] : memref<8x2x128xf32, #tpu.memory_space<vmem>>, vector<1x2x128xf32>
    %54 = vector.shape_cast %53 : vector<1x2x128xf32> to vector<2x128xf32>
    %55 = vector.shape_cast %51 : vector<2x128xf32> to vector<1x2x128xf32>
    tpu.vector_store %arg11[%52, %c0_29, %c0_30], %55 {strides = array<i32>} : memref<8x2x128xf32, #tpu.memory_space<vmem>>, vector<1x2x128xf32>,
    %c5_i32 = arith.constant 5 : i32
    %56 = arith.index_cast %c5_i32 : i32 to index
    %c0_31 = arith.constant 0 : index
    %c0_32 = arith.constant 0 : index
    %57 = vector.load %arg2[%56, %c0_31, %c0_32] : memref<8x2x16xbf16, #tpu.memory_space<vmem>>, vector<1x2x16xbf16>
    %58 = vector.shape_cast %57 : vector<1x2x16xbf16> to vector<2x16xbf16>
    %cst_33 = arith.constant dense<0.000000e+00> : vector<2x128xf32>
    %59 = tpu.matmul %58, %3, %cst_33 {dimension_numbers = #tpu.dot_dimension_numbers<[1], [0], [0], [1], [0, 0, 1, 1], [], []>} : vector<2x16xbf16>, vector<16x128xbf16>, vector<2x128xf32> -> vector<2x128xf32>
    %60 = vector.broadcast %5 : vector<1x128xf32> to vector<2x128xf32>
    %61 = arith.addf %59, %60 : vector<2x128xf32>
    %62 = arith.index_cast %c5_i32 : i32 to index
    %c0_34 = arith.constant 0 : index
    %c0_35 = arith.constant 0 : index
    %63 = vector.load %arg11[%62, %c0_34, %c0_35] : memref<8x2x128xf32, #tpu.memory_space<vmem>>, vector<1x2x128xf32>
    %64 = vector.shape_cast %63 : vector<1x2x128xf32> to vector<2x128xf32>
    %65 = vector.shape_cast %61 : vector<2x128xf32> to vector<1x2x128xf32>
    tpu.vector_store %arg11[%62, %c0_34, %c0_35], %65 {strides = array<i32>} : memref<8x2x128xf32, #tpu.memory_space<vmem>>, vector<1x2x128xf32>,
    %c6_i32 = arith.constant 6 : i32
    %66 = arith.index_cast %c6_i32 : i32 to index
    %c0_36 = arith.constant 0 : index
    %c0_37 = arith.constant 0 : index
    %67 = vector.load %arg2[%66, %c0_36, %c0_37] : memref<8x2x16xbf16, #tpu.memory_space<vmem>>, vector<1x2x16xbf16>
    %68 = vector.shape_cast %67 : vector<1x2x16xbf16> to vector<2x16xbf16>
    %cst_38 = arith.constant dense<0.000000e+00> : vector<2x128xf32>
    %69 = tpu.matmul %68, %3, %cst_38 {dimension_numbers = #tpu.dot_dimension_numbers<[1], [0], [0], [1], [0, 0, 1, 1], [], []>} : vector<2x16xbf16>, vector<16x128xbf16>, vector<2x128xf32> -> vector<2x128xf32>
    %70 = vector.broadcast %5 : vector<1x128xf32> to vector<2x128xf32>
    %71 = arith.addf %69, %70 : vector<2x128xf32>
    %72 = arith.index_cast %c6_i32 : i32 to index
    %c0_39 = arith.constant 0 : index
    %c0_40 = arith.constant 0 : index
    %73 = vector.load %arg11[%72, %c0_39, %c0_40] : memref<8x2x128xf32, #tpu.memory_space<vmem>>, vector<1x2x128xf32>
    %74 = vector.shape_cast %73 : vector<1x2x128xf32> to vector<2x128xf32>
    %75 = vector.shape_cast %71 : vector<2x128xf32> to vector<1x2x128xf32>
    tpu.vector_store %arg11[%72, %c0_39, %c0_40], %75 {strides = array<i32>} : memref<8x2x128xf32, #tpu.memory_space<vmem>>, vector<1x2x128xf32>,
    %c7_i32 = arith.constant 7 : i32
    %76 = arith.index_cast %c7_i32 : i32 to index
    %c0_41 = arith.constant 0 : index
    %c0_42 = arith.constant 0 : index
    %77 = vector.load %arg2[%76, %c0_41, %c0_42] : memref<8x2x16xbf16, #tpu.memory_space<vmem>>, vector<1x2x16xbf16>
    %78 = vector.shape_cast %77 : vector<1x2x16xbf16> to vector<2x16xbf16>
    %cst_43 = arith.constant dense<0.000000e+00> : vector<2x128xf32>
    %79 = tpu.matmul %78, %3, %cst_43 {dimension_numbers = #tpu.dot_dimension_numbers<[1], [0], [0], [1], [0, 0, 1, 1], [], []>} : vector<2x16xbf16>, vector<16x128xbf16>, vector<2x128xf32> -> vector<2x128xf32>
    %80 = vector.broadcast %5 : vector<1x128xf32> to vector<2x128xf32>
    %81 = arith.addf %79, %80 : vector<2x128xf32>
    %82 = arith.index_cast %c7_i32 : i32 to index
    %c0_44 = arith.constant 0 : index
    %c0_45 = arith.constant 0 : index
    %83 = vector.load %arg11[%82, %c0_44, %c0_45] : memref<8x2x128xf32, #tpu.memory_space<vmem>>, vector<1x2x128xf32>
    %84 = vector.shape_cast %83 : vector<1x2x128xf32> to vector<2x128xf32>
    %85 = vector.shape_cast %81 : vector<2x128xf32> to vector<1x2x128xf32>
    tpu.vector_store %arg11[%82, %c0_44, %c0_45], %85 {strides = array<i32>} : memref<8x2x128xf32, #tpu.memory_space<vmem>>, vector<1x2x128xf32>,
    %c8_i32 = arith.constant 8 : i32
    %c0_i32_46 = arith.constant 0 : i32
    %86 = arith.index_cast %c0_i32_46 : i32 to index
    %c0_47 = arith.constant 0 : index
    %c0_48 = arith.constant 0 : index
    %87 = vector.load %arg11[%86, %c0_47, %c0_48] : memref<8x2x128xf32, #tpu.memory_space<vmem>>, vector<1x2x128xf32>
    %88 = vector.shape_cast %87 : vector<1x2x128xf32> to vector<2x128xf32>
    %c0_49 = arith.constant 0 : index
    %c0_50 = arith.constant 0 : index
    %89 = vector.load %arg12[%c0_49, %c0_50] : memref<2x32xf32, #tpu.memory_space<vmem>>, vector<2x32xf32>
    %90 = arith.truncf %89 : vector<2x32xf32> to vector<2x32xbf16>
    %cst_51 = arith.constant dense<0.000000e+00> : vector<2x128xf32>
    %91 = tpu.matmul %90, %4, %cst_51 {dimension_numbers = #tpu.dot_dimension_numbers<[1], [0], [0], [1], [0, 0, 1, 1], [], []>} : vector<2x32xbf16>, vector<32x128xbf16>, vector<2x128xf32> -> vector<2x128xf32>
    %92 = arith.addf %88, %91 : vector<2x128xf32>
    %93 = vector.extract_strided_slice %92 {offsets = [0, 0], sizes = [2, 32], strides = [1, 1]} : vector<2x128xf32> to vector<2x32xf32>
    %94 = arith.negf %93 : vector<2x32xf32>
    %95 = math.exp %94 : vector<2x32xf32>
    %cst_52 = arith.constant 1.000000e+00 : f32
    %96 = vector.broadcast %cst_52 : f32 to vector<2x32xf32>
    %97 = arith.addf %96, %95 : vector<2x32xf32>
    %98 = arith.divf %96, %97 : vector<2x32xf32>
    %99 = vector.extract_strided_slice %92 {offsets = [0, 32], sizes = [2, 32], strides = [1, 1]} : vector<2x128xf32> to vector<2x32xf32>
    %100 = arith.negf %99 : vector<2x32xf32>
    %101 = math.exp %100 : vector<2x32xf32>
    %cst_53 = arith.constant 1.000000e+00 : f32
    %102 = vector.broadcast %cst_53 : f32 to vector<2x32xf32>
    %103 = arith.addf %102, %101 : vector<2x32xf32>
    %104 = arith.divf %102, %103 : vector<2x32xf32>
    %105 = vector.extract_strided_slice %92 {offsets = [0, 64], sizes = [2, 32], strides = [1, 1]} : vector<2x128xf32> to vector<2x32xf32>
    %106 = math.tanh %105 : vector<2x32xf32>
    %107 = vector.extract_strided_slice %92 {offsets = [0, 96], sizes = [2, 32], strides = [1, 1]} : vector<2x128xf32> to vector<2x32xf32>
    %108 = arith.negf %107 : vector<2x32xf32>
    %109 = math.exp %108 : vector<2x32xf32>
    %cst_54 = arith.constant 1.000000e+00 : f32
    %110 = vector.broadcast %cst_54 : f32 to vector<2x32xf32>
    %111 = arith.addf %110, %109 : vector<2x32xf32>
    %112 = arith.divf %110, %111 : vector<2x32xf32>
    %c0_55 = arith.constant 0 : index
    %c0_56 = arith.constant 0 : index
    %113 = vector.load %arg13[%c0_55, %c0_56] : memref<2x32xf32, #tpu.memory_space<vmem>>, vector<2x32xf32>
    %114 = arith.mulf %104, %113 : vector<2x32xf32>
    %115 = arith.mulf %98, %106 : vector<2x32xf32>
    %116 = arith.addf %114, %115 : vector<2x32xf32>
    %117 = math.tanh %116 : vector<2x32xf32>
    %118 = arith.mulf %112, %117 : vector<2x32xf32>
    %c0_57 = arith.constant 0 : index
    %c0_58 = arith.constant 0 : index
    %119 = vector.load %arg13[%c0_57, %c0_58] : memref<2x32xf32, #tpu.memory_space<vmem>>, vector<2x32xf32>
    tpu.vector_store %arg13[%c0_57, %c0_58], %116 {strides = array<i32>} : memref<2x32xf32, #tpu.memory_space<vmem>>, vector<2x32xf32>,
    %c0_59 = arith.constant 0 : index
    %c0_60 = arith.constant 0 : index
    %120 = vector.load %arg12[%c0_59, %c0_60] : memref<2x32xf32, #tpu.memory_space<vmem>>, vector<2x32xf32>
    tpu.vector_store %arg12[%c0_59, %c0_60], %118 {strides = array<i32>} : memref<2x32xf32, #tpu.memory_space<vmem>>, vector<2x32xf32>,
    %121 = arith.truncf %118 : vector<2x32xf32> to vector<2x32xbf16>
    %122 = arith.index_cast %c0_i32_46 : i32 to index
    %c0_61 = arith.constant 0 : index
    %c0_62 = arith.constant 0 : index
    %123 = vector.load %arg8[%122, %c0_61, %c0_62] : memref<8x2x32xbf16, #tpu.memory_space<vmem>>, vector<1x2x32xbf16>
    %124 = vector.shape_cast %123 : vector<1x2x32xbf16> to vector<2x32xbf16>
    %125 = vector.shape_cast %121 : vector<2x32xbf16> to vector<1x2x32xbf16>
    tpu.vector_store %arg8[%122, %c0_61, %c0_62], %125 {strides = array<i32>} : memref<8x2x32xbf16, #tpu.memory_space<vmem>>, vector<1x2x32xbf16>,
    %c1_i32_63 = arith.constant 1 : i32
    %126 = arith.index_cast %c1_i32_63 : i32 to index
    %c0_64 = arith.constant 0 : index
    %c0_65 = arith.constant 0 : index
    %127 = vector.load %arg11[%126, %c0_64, %c0_65] : memref<8x2x128xf32, #tpu.memory_space<vmem>>, vector<1x2x128xf32>
    %128 = vector.shape_cast %127 : vector<1x2x128xf32> to vector<2x128xf32>
    %c0_66 = arith.constant 0 : index
    %c0_67 = arith.constant 0 : index
    %129 = vector.load %arg12[%c0_66, %c0_67] : memref<2x32xf32, #tpu.memory_space<vmem>>, vector<2x32xf32>
    %130 = arith.truncf %129 : vector<2x32xf32> to vector<2x32xbf16>
    %cst_68 = arith.constant dense<0.000000e+00> : vector<2x128xf32>
    %131 = tpu.matmul %130, %4, %cst_68 {dimension_numbers = #tpu.dot_dimension_numbers<[1], [0], [0], [1], [0, 0, 1, 1], [], []>} : vector<2x32xbf16>, vector<32x128xbf16>, vector<2x128xf32> -> vector<2x128xf32>
    %132 = arith.addf %128, %131 : vector<2x128xf32>
    %133 = vector.extract_strided_slice %132 {offsets = [0, 0], sizes = [2, 32], strides = [1, 1]} : vector<2x128xf32> to vector<2x32xf32>
    %134 = arith.negf %133 : vector<2x32xf32>
    %135 = math.exp %134 : vector<2x32xf32>
    %cst_69 = arith.constant 1.000000e+00 : f32
    %136 = vector.broadcast %cst_69 : f32 to vector<2x32xf32>
    %137 = arith.addf %136, %135 : vector<2x32xf32>
    %138 = arith.divf %136, %137 : vector<2x32xf32>
    %139 = vector.extract_strided_slice %132 {offsets = [0, 32], sizes = [2, 32], strides = [1, 1]} : vector<2x128xf32> to vector<2x32xf32>
    %140 = arith.negf %139 : vector<2x32xf32>
    %141 = math.exp %140 : vector<2x32xf32>
    %cst_70 = arith.constant 1.000000e+00 : f32
    %142 = vector.broadcast %cst_70 : f32 to vector<2x32xf32>
    %143 = arith.addf %142, %141 : vector<2x32xf32>
    %144 = arith.divf %142, %143 : vector<2x32xf32>
    %145 = vector.extract_strided_slice %132 {offsets = [0, 64], sizes = [2, 32], strides = [1, 1]} : vector<2x128xf32> to vector<2x32xf32>
    %146 = math.tanh %145 : vector<2x32xf32>
    %147 = vector.extract_strided_slice %132 {offsets = [0, 96], sizes = [2, 32], strides = [1, 1]} : vector<2x128xf32> to vector<2x32xf32>
    %148 = arith.negf %147 : vector<2x32xf32>
    %149 = math.exp %148 : vector<2x32xf32>
    %cst_71 = arith.constant 1.000000e+00 : f32
    %150 = vector.broadcast %cst_71 : f32 to vector<2x32xf32>
    %151 = arith.addf %150, %149 : vector<2x32xf32>
    %152 = arith.divf %150, %151 : vector<2x32xf32>
    %c0_72 = arith.constant 0 : index
    %c0_73 = arith.constant 0 : index
    %153 = vector.load %arg13[%c0_72, %c0_73] : memref<2x32xf32, #tpu.memory_space<vmem>>, vector<2x32xf32>
    %154 = arith.mulf %144, %153 : vector<2x32xf32>
    %155 = arith.mulf %138, %146 : vector<2x32xf32>
    %156 = arith.addf %154, %155 : vector<2x32xf32>
    %157 = math.tanh %156 : vector<2x32xf32>
    %158 = arith.mulf %152, %157 : vector<2x32xf32>
    %c0_74 = arith.constant 0 : index
    %c0_75 = arith.constant 0 : index
    %159 = vector.load %arg13[%c0_74, %c0_75] : memref<2x32xf32, #tpu.memory_space<vmem>>, vector<2x32xf32>
    tpu.vector_store %arg13[%c0_74, %c0_75], %156 {strides = array<i32>} : memref<2x32xf32, #tpu.memory_space<vmem>>, vector<2x32xf32>,
    %c0_76 = arith.constant 0 : index
    %c0_77 = arith.constant 0 : index
    %160 = vector.load %arg12[%c0_76, %c0_77] : memref<2x32xf32, #tpu.memory_space<vmem>>, vector<2x32xf32>
    tpu.vector_store %arg12[%c0_76, %c0_77], %158 {strides = array<i32>} : memref<2x32xf32, #tpu.memory_space<vmem>>, vector<2x32xf32>,
    %161 = arith.truncf %158 : vector<2x32xf32> to vector<2x32xbf16>
    %162 = arith.index_cast %c1_i32_63 : i32 to index
    %c0_78 = arith.constant 0 : index
    %c0_79 = arith.constant 0 : index
    %163 = vector.load %arg8[%162, %c0_78, %c0_79] : memref<8x2x32xbf16, #tpu.memory_space<vmem>>, vector<1x2x32xbf16>
    %164 = vector.shape_cast %163 : vector<1x2x32xbf16> to vector<2x32xbf16>
    %165 = vector.shape_cast %161 : vector<2x32xbf16> to vector<1x2x32xbf16>
    tpu.vector_store %arg8[%162, %c0_78, %c0_79], %165 {strides = array<i32>} : memref<8x2x32xbf16, #tpu.memory_space<vmem>>, vector<1x2x32xbf16>,
    %c2_i32_80 = arith.constant 2 : i32
    %166 = arith.index_cast %c2_i32_80 : i32 to index
    %c0_81 = arith.constant 0 : index
    %c0_82 = arith.constant 0 : index
    %167 = vector.load %arg11[%166, %c0_81, %c0_82] : memref<8x2x128xf32, #tpu.memory_space<vmem>>, vector<1x2x128xf32>
    %168 = vector.shape_cast %167 : vector<1x2x128xf32> to vector<2x128xf32>
    %c0_83 = arith.constant 0 : index
    %c0_84 = arith.constant 0 : index
    %169 = vector.load %arg12[%c0_83, %c0_84] : memref<2x32xf32, #tpu.memory_space<vmem>>, vector<2x32xf32>
    %170 = arith.truncf %169 : vector<2x32xf32> to vector<2x32xbf16>
    %cst_85 = arith.constant dense<0.000000e+00> : vector<2x128xf32>
    %171 = tpu.matmul %170, %4, %cst_85 {dimension_numbers = #tpu.dot_dimension_numbers<[1], [0], [0], [1], [0, 0, 1, 1], [], []>} : vector<2x32xbf16>, vector<32x128xbf16>, vector<2x128xf32> -> vector<2x128xf32>
    %172 = arith.addf %168, %171 : vector<2x128xf32>
    %173 = vector.extract_strided_slice %172 {offsets = [0, 0], sizes = [2, 32], strides = [1, 1]} : vector<2x128xf32> to vector<2x32xf32>
    %174 = arith.negf %173 : vector<2x32xf32>
    %175 = math.exp %174 : vector<2x32xf32>
    %cst_86 = arith.constant 1.000000e+00 : f32
    %176 = vector.broadcast %cst_86 : f32 to vector<2x32xf32>
    %177 = arith.addf %176, %175 : vector<2x32xf32>
    %178 = arith.divf %176, %177 : vector<2x32xf32>
    %179 = vector.extract_strided_slice %172 {offsets = [0, 32], sizes = [2, 32], strides = [1, 1]} : vector<2x128xf32> to vector<2x32xf32>
    %180 = arith.negf %179 : vector<2x32xf32>
    %181 = math.exp %180 : vector<2x32xf32>
    %cst_87 = arith.constant 1.000000e+00 : f32
    %182 = vector.broadcast %cst_87 : f32 to vector<2x32xf32>
    %183 = arith.addf %182, %181 : vector<2x32xf32>
    %184 = arith.divf %182, %183 : vector<2x32xf32>
    %185 = vector.extract_strided_slice %172 {offsets = [0, 64], sizes = [2, 32], strides = [1, 1]} : vector<2x128xf32> to vector<2x32xf32>
    %186 = math.tanh %185 : vector<2x32xf32>
    %187 = vector.extract_strided_slice %172 {offsets = [0, 96], sizes = [2, 32], strides = [1, 1]} : vector<2x128xf32> to vector<2x32xf32>
    %188 = arith.negf %187 : vector<2x32xf32>
    %189 = math.exp %188 : vector<2x32xf32>
    %cst_88 = arith.constant 1.000000e+00 : f32
    %190 = vector.broadcast %cst_88 : f32 to vector<2x32xf32>
    %191 = arith.addf %190, %189 : vector<2x32xf32>
    %192 = arith.divf %190, %191 : vector<2x32xf32>
    %c0_89 = arith.constant 0 : index
    %c0_90 = arith.constant 0 : index
    %193 = vector.load %arg13[%c0_89, %c0_90] : memref<2x32xf32, #tpu.memory_space<vmem>>, vector<2x32xf32>
    %194 = arith.mulf %184, %193 : vector<2x32xf32>
    %195 = arith.mulf %178, %186 : vector<2x32xf32>
    %196 = arith.addf %194, %195 : vector<2x32xf32>
    %197 = math.tanh %196 : vector<2x32xf32>
    %198 = arith.mulf %192, %197 : vector<2x32xf32>
    %c0_91 = arith.constant 0 : index
    %c0_92 = arith.constant 0 : index
    %199 = vector.load %arg13[%c0_91, %c0_92] : memref<2x32xf32, #tpu.memory_space<vmem>>, vector<2x32xf32>
    tpu.vector_store %arg13[%c0_91, %c0_92], %196 {strides = array<i32>} : memref<2x32xf32, #tpu.memory_space<vmem>>, vector<2x32xf32>,
    %c0_93 = arith.constant 0 : index
    %c0_94 = arith.constant 0 : index
    %200 = vector.load %arg12[%c0_93, %c0_94] : memref<2x32xf32, #tpu.memory_space<vmem>>, vector<2x32xf32>
    tpu.vector_store %arg12[%c0_93, %c0_94], %198 {strides = array<i32>} : memref<2x32xf32, #tpu.memory_space<vmem>>, vector<2x32xf32>,
    %201 = arith.truncf %198 : vector<2x32xf32> to vector<2x32xbf16>
    %202 = arith.index_cast %c2_i32_80 : i32 to index
    %c0_95 = arith.constant 0 : index
    %c0_96 = arith.constant 0 : index
    %203 = vector.load %arg8[%202, %c0_95, %c0_96] : memref<8x2x32xbf16, #tpu.memory_space<vmem>>, vector<1x2x32xbf16>
    %204 = vector.shape_cast %203 : vector<1x2x32xbf16> to vector<2x32xbf16>
    %205 = vector.shape_cast %201 : vector<2x32xbf16> to vector<1x2x32xbf16>
    tpu.vector_store %arg8[%202, %c0_95, %c0_96], %205 {strides = array<i32>} : memref<8x2x32xbf16, #tpu.memory_space<vmem>>, vector<1x2x32xbf16>,
    %c3_i32_97 = arith.constant 3 : i32
    %206 = arith.index_cast %c3_i32_97 : i32 to index
    %c0_98 = arith.constant 0 : index
    %c0_99 = arith.constant 0 : index
    %207 = vector.load %arg11[%206, %c0_98, %c0_99] : memref<8x2x128xf32, #tpu.memory_space<vmem>>, vector<1x2x128xf32>
    %208 = vector.shape_cast %207 : vector<1x2x128xf32> to vector<2x128xf32>
    %c0_100 = arith.constant 0 : index
    %c0_101 = arith.constant 0 : index
    %209 = vector.load %arg12[%c0_100, %c0_101] : memref<2x32xf32, #tpu.memory_space<vmem>>, vector<2x32xf32>
    %210 = arith.truncf %209 : vector<2x32xf32> to vector<2x32xbf16>
    %cst_102 = arith.constant dense<0.000000e+00> : vector<2x128xf32>
    %211 = tpu.matmul %210, %4, %cst_102 {dimension_numbers = #tpu.dot_dimension_numbers<[1], [0], [0], [1], [0, 0, 1, 1], [], []>} : vector<2x32xbf16>, vector<32x128xbf16>, vector<2x128xf32> -> vector<2x128xf32>
    %212 = arith.addf %208, %211 : vector<2x128xf32>
    %213 = vector.extract_strided_slice %212 {offsets = [0, 0], sizes = [2, 32], strides = [1, 1]} : vector<2x128xf32> to vector<2x32xf32>
    %214 = arith.negf %213 : vector<2x32xf32>
    %215 = math.exp %214 : vector<2x32xf32>
    %cst_103 = arith.constant 1.000000e+00 : f32
    %216 = vector.broadcast %cst_103 : f32 to vector<2x32xf32>
    %217 = arith.addf %216, %215 : vector<2x32xf32>
    %218 = arith.divf %216, %217 : vector<2x32xf32>
    %219 = vector.extract_strided_slice %212 {offsets = [0, 32], sizes = [2, 32], strides = [1, 1]} : vector<2x128xf32> to vector<2x32xf32>
    %220 = arith.negf %219 : vector<2x32xf32>
    %221 = math.exp %220 : vector<2x32xf32>
    %cst_104 = arith.constant 1.000000e+00 : f32
    %222 = vector.broadcast %cst_104 : f32 to vector<2x32xf32>
    %223 = arith.addf %222, %221 : vector<2x32xf32>
    %224 = arith.divf %222, %223 : vector<2x32xf32>
    %225 = vector.extract_strided_slice %212 {offsets = [0, 64], sizes = [2, 32], strides = [1, 1]} : vector<2x128xf32> to vector<2x32xf32>
    %226 = math.tanh %225 : vector<2x32xf32>
    %227 = vector.extract_strided_slice %212 {offsets = [0, 96], sizes = [2, 32], strides = [1, 1]} : vector<2x128xf32> to vector<2x32xf32>
    %228 = arith.negf %227 : vector<2x32xf32>
    %229 = math.exp %228 : vector<2x32xf32>
    %cst_105 = arith.constant 1.000000e+00 : f32
    %230 = vector.broadcast %cst_105 : f32 to vector<2x32xf32>
    %231 = arith.addf %230, %229 : vector<2x32xf32>
    %232 = arith.divf %230, %231 : vector<2x32xf32>
    %c0_106 = arith.constant 0 : index
    %c0_107 = arith.constant 0 : index
    %233 = vector.load %arg13[%c0_106, %c0_107] : memref<2x32xf32, #tpu.memory_space<vmem>>, vector<2x32xf32>
    %234 = arith.mulf %224, %233 : vector<2x32xf32>
    %235 = arith.mulf %218, %226 : vector<2x32xf32>
    %236 = arith.addf %234, %235 : vector<2x32xf32>
    %237 = math.tanh %236 : vector<2x32xf32>
    %238 = arith.mulf %232, %237 : vector<2x32xf32>
    %c0_108 = arith.constant 0 : index
    %c0_109 = arith.constant 0 : index
    %239 = vector.load %arg13[%c0_108, %c0_109] : memref<2x32xf32, #tpu.memory_space<vmem>>, vector<2x32xf32>
    tpu.vector_store %arg13[%c0_108, %c0_109], %236 {strides = array<i32>} : memref<2x32xf32, #tpu.memory_space<vmem>>, vector<2x32xf32>,
    %c0_110 = arith.constant 0 : index
    %c0_111 = arith.constant 0 : index
    %240 = vector.load %arg12[%c0_110, %c0_111] : memref<2x32xf32, #tpu.memory_space<vmem>>, vector<2x32xf32>
    tpu.vector_store %arg12[%c0_110, %c0_111], %238 {strides = array<i32>} : memref<2x32xf32, #tpu.memory_space<vmem>>, vector<2x32xf32>,
    %241 = arith.truncf %238 : vector<2x32xf32> to vector<2x32xbf16>
    %242 = arith.index_cast %c3_i32_97 : i32 to index
    %c0_112 = arith.constant 0 : index
    %c0_113 = arith.constant 0 : index
    %243 = vector.load %arg8[%242, %c0_112, %c0_113] : memref<8x2x32xbf16, #tpu.memory_space<vmem>>, vector<1x2x32xbf16>
    %244 = vector.shape_cast %243 : vector<1x2x32xbf16> to vector<2x32xbf16>
    %245 = vector.shape_cast %241 : vector<2x32xbf16> to vector<1x2x32xbf16>
    tpu.vector_store %arg8[%242, %c0_112, %c0_113], %245 {strides = array<i32>} : memref<8x2x32xbf16, #tpu.memory_space<vmem>>, vector<1x2x32xbf16>,
    %c4_i32_114 = arith.constant 4 : i32
    %246 = arith.index_cast %c4_i32_114 : i32 to index
    %c0_115 = arith.constant 0 : index
    %c0_116 = arith.constant 0 : index
    %247 = vector.load %arg11[%246, %c0_115, %c0_116] : memref<8x2x128xf32, #tpu.memory_space<vmem>>, vector<1x2x128xf32>
    %248 = vector.shape_cast %247 : vector<1x2x128xf32> to vector<2x128xf32>
    %c0_117 = arith.constant 0 : index
    %c0_118 = arith.constant 0 : index
    %249 = vector.load %arg12[%c0_117, %c0_118] : memref<2x32xf32, #tpu.memory_space<vmem>>, vector<2x32xf32>
    %250 = arith.truncf %249 : vector<2x32xf32> to vector<2x32xbf16>
    %cst_119 = arith.constant dense<0.000000e+00> : vector<2x128xf32>
    %251 = tpu.matmul %250, %4, %cst_119 {dimension_numbers = #tpu.dot_dimension_numbers<[1], [0], [0], [1], [0, 0, 1, 1], [], []>} : vector<2x32xbf16>, vector<32x128xbf16>, vector<2x128xf32> -> vector<2x128xf32>
    %252 = arith.addf %248, %251 : vector<2x128xf32>
    %253 = vector.extract_strided_slice %252 {offsets = [0, 0], sizes = [2, 32], strides = [1, 1]} : vector<2x128xf32> to vector<2x32xf32>
    %254 = arith.negf %253 : vector<2x32xf32>
    %255 = math.exp %254 : vector<2x32xf32>
    %cst_120 = arith.constant 1.000000e+00 : f32
    %256 = vector.broadcast %cst_120 : f32 to vector<2x32xf32>
    %257 = arith.addf %256, %255 : vector<2x32xf32>
    %258 = arith.divf %256, %257 : vector<2x32xf32>
    %259 = vector.extract_strided_slice %252 {offsets = [0, 32], sizes = [2, 32], strides = [1, 1]} : vector<2x128xf32> to vector<2x32xf32>
    %260 = arith.negf %259 : vector<2x32xf32>
    %261 = math.exp %260 : vector<2x32xf32>
    %cst_121 = arith.constant 1.000000e+00 : f32
    %262 = vector.broadcast %cst_121 : f32 to vector<2x32xf32>
    %263 = arith.addf %262, %261 : vector<2x32xf32>
    %264 = arith.divf %262, %263 : vector<2x32xf32>
    %265 = vector.extract_strided_slice %252 {offsets = [0, 64], sizes = [2, 32], strides = [1, 1]} : vector<2x128xf32> to vector<2x32xf32>
    %266 = math.tanh %265 : vector<2x32xf32>
    %267 = vector.extract_strided_slice %252 {offsets = [0, 96], sizes = [2, 32], strides = [1, 1]} : vector<2x128xf32> to vector<2x32xf32>
    %268 = arith.negf %267 : vector<2x32xf32>
    %269 = math.exp %268 : vector<2x32xf32>
    %cst_122 = arith.constant 1.000000e+00 : f32
    %270 = vector.broadcast %cst_122 : f32 to vector<2x32xf32>
    %271 = arith.addf %270, %269 : vector<2x32xf32>
    %272 = arith.divf %270, %271 : vector<2x32xf32>
    %c0_123 = arith.constant 0 : index
    %c0_124 = arith.constant 0 : index
    %273 = vector.load %arg13[%c0_123, %c0_124] : memref<2x32xf32, #tpu.memory_space<vmem>>, vector<2x32xf32>
    %274 = arith.mulf %264, %273 : vector<2x32xf32>
    %275 = arith.mulf %258, %266 : vector<2x32xf32>
    %276 = arith.addf %274, %275 : vector<2x32xf32>
    %277 = math.tanh %276 : vector<2x32xf32>
    %278 = arith.mulf %272, %277 : vector<2x32xf32>
    %c0_125 = arith.constant 0 : index
    %c0_126 = arith.constant 0 : index
    %279 = vector.load %arg13[%c0_125, %c0_126] : memref<2x32xf32, #tpu.memory_space<vmem>>, vector<2x32xf32>
    tpu.vector_store %arg13[%c0_125, %c0_126], %276 {strides = array<i32>} : memref<2x32xf32, #tpu.memory_space<vmem>>, vector<2x32xf32>,
    %c0_127 = arith.constant 0 : index
    %c0_128 = arith.constant 0 : index
    %280 = vector.load %arg12[%c0_127, %c0_128] : memref<2x32xf32, #tpu.memory_space<vmem>>, vector<2x32xf32>
    tpu.vector_store %arg12[%c0_127, %c0_128], %278 {strides = array<i32>} : memref<2x32xf32, #tpu.memory_space<vmem>>, vector<2x32xf32>,
    %281 = arith.truncf %278 : vector<2x32xf32> to vector<2x32xbf16>
    %282 = arith.index_cast %c4_i32_114 : i32 to index
    %c0_129 = arith.constant 0 : index
    %c0_130 = arith.constant 0 : index
    %283 = vector.load %arg8[%282, %c0_129, %c0_130] : memref<8x2x32xbf16, #tpu.memory_space<vmem>>, vector<1x2x32xbf16>
    %284 = vector.shape_cast %283 : vector<1x2x32xbf16> to vector<2x32xbf16>
    %285 = vector.shape_cast %281 : vector<2x32xbf16> to vector<1x2x32xbf16>
    tpu.vector_store %arg8[%282, %c0_129, %c0_130], %285 {strides = array<i32>} : memref<8x2x32xbf16, #tpu.memory_space<vmem>>, vector<1x2x32xbf16>,
    %c5_i32_131 = arith.constant 5 : i32
    %286 = arith.index_cast %c5_i32_131 : i32 to index
    %c0_132 = arith.constant 0 : index
    %c0_133 = arith.constant 0 : index
    %287 = vector.load %arg11[%286, %c0_132, %c0_133] : memref<8x2x128xf32, #tpu.memory_space<vmem>>, vector<1x2x128xf32>
    %288 = vector.shape_cast %287 : vector<1x2x128xf32> to vector<2x128xf32>
    %c0_134 = arith.constant 0 : index
    %c0_135 = arith.constant 0 : index
    %289 = vector.load %arg12[%c0_134, %c0_135] : memref<2x32xf32, #tpu.memory_space<vmem>>, vector<2x32xf32>
    %290 = arith.truncf %289 : vector<2x32xf32> to vector<2x32xbf16>
    %cst_136 = arith.constant dense<0.000000e+00> : vector<2x128xf32>
    %291 = tpu.matmul %290, %4, %cst_136 {dimension_numbers = #tpu.dot_dimension_numbers<[1], [0], [0], [1], [0, 0, 1, 1], [], []>} : vector<2x32xbf16>, vector<32x128xbf16>, vector<2x128xf32> -> vector<2x128xf32>
    %292 = arith.addf %288, %291 : vector<2x128xf32>
    %293 = vector.extract_strided_slice %292 {offsets = [0, 0], sizes = [2, 32], strides = [1, 1]} : vector<2x128xf32> to vector<2x32xf32>
    %294 = arith.negf %293 : vector<2x32xf32>
    %295 = math.exp %294 : vector<2x32xf32>
    %cst_137 = arith.constant 1.000000e+00 : f32
    %296 = vector.broadcast %cst_137 : f32 to vector<2x32xf32>
    %297 = arith.addf %296, %295 : vector<2x32xf32>
    %298 = arith.divf %296, %297 : vector<2x32xf32>
    %299 = vector.extract_strided_slice %292 {offsets = [0, 32], sizes = [2, 32], strides = [1, 1]} : vector<2x128xf32> to vector<2x32xf32>
    %300 = arith.negf %299 : vector<2x32xf32>
    %301 = math.exp %300 : vector<2x32xf32>
    %cst_138 = arith.constant 1.000000e+00 : f32
    %302 = vector.broadcast %cst_138 : f32 to vector<2x32xf32>
    %303 = arith.addf %302, %301 : vector<2x32xf32>
    %304 = arith.divf %302, %303 : vector<2x32xf32>
    %305 = vector.extract_strided_slice %292 {offsets = [0, 64], sizes = [2, 32], strides = [1, 1]} : vector<2x128xf32> to vector<2x32xf32>
    %306 = math.tanh %305 : vector<2x32xf32>
    %307 = vector.extract_strided_slice %292 {offsets = [0, 96], sizes = [2, 32], strides = [1, 1]} : vector<2x128xf32> to vector<2x32xf32>
    %308 = arith.negf %307 : vector<2x32xf32>
    %309 = math.exp %308 : vector<2x32xf32>
    %cst_139 = arith.constant 1.000000e+00 : f32
    %310 = vector.broadcast %cst_139 : f32 to vector<2x32xf32>
    %311 = arith.addf %310, %309 : vector<2x32xf32>
    %312 = arith.divf %310, %311 : vector<2x32xf32>
    %c0_140 = arith.constant 0 : index
    %c0_141 = arith.constant 0 : index
    %313 = vector.load %arg13[%c0_140, %c0_141] : memref<2x32xf32, #tpu.memory_space<vmem>>, vector<2x32xf32>
    %314 = arith.mulf %304, %313 : vector<2x32xf32>
    %315 = arith.mulf %298, %306 : vector<2x32xf32>
    %316 = arith.addf %314, %315 : vector<2x32xf32>
    %317 = math.tanh %316 : vector<2x32xf32>
    %318 = arith.mulf %312, %317 : vector<2x32xf32>
    %c0_142 = arith.constant 0 : index
    %c0_143 = arith.constant 0 : index
    %319 = vector.load %arg13[%c0_142, %c0_143] : memref<2x32xf32, #tpu.memory_space<vmem>>, vector<2x32xf32>
    tpu.vector_store %arg13[%c0_142, %c0_143], %316 {strides = array<i32>} : memref<2x32xf32, #tpu.memory_space<vmem>>, vector<2x32xf32>,
    %c0_144 = arith.constant 0 : index
    %c0_145 = arith.constant 0 : index
    %320 = vector.load %arg12[%c0_144, %c0_145] : memref<2x32xf32, #tpu.memory_space<vmem>>, vector<2x32xf32>
    tpu.vector_store %arg12[%c0_144, %c0_145], %318 {strides = array<i32>} : memref<2x32xf32, #tpu.memory_space<vmem>>, vector<2x32xf32>,
    %321 = arith.truncf %318 : vector<2x32xf32> to vector<2x32xbf16>
    %322 = arith.index_cast %c5_i32_131 : i32 to index
    %c0_146 = arith.constant 0 : index
    %c0_147 = arith.constant 0 : index
    %323 = vector.load %arg8[%322, %c0_146, %c0_147] : memref<8x2x32xbf16, #tpu.memory_space<vmem>>, vector<1x2x32xbf16>
    %324 = vector.shape_cast %323 : vector<1x2x32xbf16> to vector<2x32xbf16>
    %325 = vector.shape_cast %321 : vector<2x32xbf16> to vector<1x2x32xbf16>
    tpu.vector_store %arg8[%322, %c0_146, %c0_147], %325 {strides = array<i32>} : memref<8x2x32xbf16, #tpu.memory_space<vmem>>, vector<1x2x32xbf16>,
    %c6_i32_148 = arith.constant 6 : i32
    %326 = arith.index_cast %c6_i32_148 : i32 to index
    %c0_149 = arith.constant 0 : index
    %c0_150 = arith.constant 0 : index
    %327 = vector.load %arg11[%326, %c0_149, %c0_150] : memref<8x2x128xf32, #tpu.memory_space<vmem>>, vector<1x2x128xf32>
    %328 = vector.shape_cast %327 : vector<1x2x128xf32> to vector<2x128xf32>
    %c0_151 = arith.constant 0 : index
    %c0_152 = arith.constant 0 : index
    %329 = vector.load %arg12[%c0_151, %c0_152] : memref<2x32xf32, #tpu.memory_space<vmem>>, vector<2x32xf32>
    %330 = arith.truncf %329 : vector<2x32xf32> to vector<2x32xbf16>
    %cst_153 = arith.constant dense<0.000000e+00> : vector<2x128xf32>
    %331 = tpu.matmul %330, %4, %cst_153 {dimension_numbers = #tpu.dot_dimension_numbers<[1], [0], [0], [1], [0, 0, 1, 1], [], []>} : vector<2x32xbf16>, vector<32x128xbf16>, vector<2x128xf32> -> vector<2x128xf32>
    %332 = arith.addf %328, %331 : vector<2x128xf32>
    %333 = vector.extract_strided_slice %332 {offsets = [0, 0], sizes = [2, 32], strides = [1, 1]} : vector<2x128xf32> to vector<2x32xf32>
    %334 = arith.negf %333 : vector<2x32xf32>
    %335 = math.exp %334 : vector<2x32xf32>
    %cst_154 = arith.constant 1.000000e+00 : f32
    %336 = vector.broadcast %cst_154 : f32 to vector<2x32xf32>
    %337 = arith.addf %336, %335 : vector<2x32xf32>
    %338 = arith.divf %336, %337 : vector<2x32xf32>
    %339 = vector.extract_strided_slice %332 {offsets = [0, 32], sizes = [2, 32], strides = [1, 1]} : vector<2x128xf32> to vector<2x32xf32>
    %340 = arith.negf %339 : vector<2x32xf32>
    %341 = math.exp %340 : vector<2x32xf32>
    %cst_155 = arith.constant 1.000000e+00 : f32
    %342 = vector.broadcast %cst_155 : f32 to vector<2x32xf32>
    %343 = arith.addf %342, %341 : vector<2x32xf32>
    %344 = arith.divf %342, %343 : vector<2x32xf32>
    %345 = vector.extract_strided_slice %332 {offsets = [0, 64], sizes = [2, 32], strides = [1, 1]} : vector<2x128xf32> to vector<2x32xf32>
    %346 = math.tanh %345 : vector<2x32xf32>
    %347 = vector.extract_strided_slice %332 {offsets = [0, 96], sizes = [2, 32], strides = [1, 1]} : vector<2x128xf32> to vector<2x32xf32>
    %348 = arith.negf %347 : vector<2x32xf32>
    %349 = math.exp %348 : vector<2x32xf32>
    %cst_156 = arith.constant 1.000000e+00 : f32
    %350 = vector.broadcast %cst_156 : f32 to vector<2x32xf32>
    %351 = arith.addf %350, %349 : vector<2x32xf32>
    %352 = arith.divf %350, %351 : vector<2x32xf32>
    %c0_157 = arith.constant 0 : index
    %c0_158 = arith.constant 0 : index
    %353 = vector.load %arg13[%c0_157, %c0_158] : memref<2x32xf32, #tpu.memory_space<vmem>>, vector<2x32xf32>
    %354 = arith.mulf %344, %353 : vector<2x32xf32>
    %355 = arith.mulf %338, %346 : vector<2x32xf32>
    %356 = arith.addf %354, %355 : vector<2x32xf32>
    %357 = math.tanh %356 : vector<2x32xf32>
    %358 = arith.mulf %352, %357 : vector<2x32xf32>
    %c0_159 = arith.constant 0 : index
    %c0_160 = arith.constant 0 : index
    %359 = vector.load %arg13[%c0_159, %c0_160] : memref<2x32xf32, #tpu.memory_space<vmem>>, vector<2x32xf32>
    tpu.vector_store %arg13[%c0_159, %c0_160], %356 {strides = array<i32>} : memref<2x32xf32, #tpu.memory_space<vmem>>, vector<2x32xf32>,
    %c0_161 = arith.constant 0 : index
    %c0_162 = arith.constant 0 : index
    %360 = vector.load %arg12[%c0_161, %c0_162] : memref<2x32xf32, #tpu.memory_space<vmem>>, vector<2x32xf32>
    tpu.vector_store %arg12[%c0_161, %c0_162], %358 {strides = array<i32>} : memref<2x32xf32, #tpu.memory_space<vmem>>, vector<2x32xf32>,
    %361 = arith.truncf %358 : vector<2x32xf32> to vector<2x32xbf16>
    %362 = arith.index_cast %c6_i32_148 : i32 to index
    %c0_163 = arith.constant 0 : index
    %c0_164 = arith.constant 0 : index
    %363 = vector.load %arg8[%362, %c0_163, %c0_164] : memref<8x2x32xbf16, #tpu.memory_space<vmem>>, vector<1x2x32xbf16>
    %364 = vector.shape_cast %363 : vector<1x2x32xbf16> to vector<2x32xbf16>
    %365 = vector.shape_cast %361 : vector<2x32xbf16> to vector<1x2x32xbf16>
    tpu.vector_store %arg8[%362, %c0_163, %c0_164], %365 {strides = array<i32>} : memref<8x2x32xbf16, #tpu.memory_space<vmem>>, vector<1x2x32xbf16>,
    %c7_i32_165 = arith.constant 7 : i32
    %366 = arith.index_cast %c7_i32_165 : i32 to index
    %c0_166 = arith.constant 0 : index
    %c0_167 = arith.constant 0 : index
    %367 = vector.load %arg11[%366, %c0_166, %c0_167] : memref<8x2x128xf32, #tpu.memory_space<vmem>>, vector<1x2x128xf32>
    %368 = vector.shape_cast %367 : vector<1x2x128xf32> to vector<2x128xf32>
    %c0_168 = arith.constant 0 : index
    %c0_169 = arith.constant 0 : index
    %369 = vector.load %arg12[%c0_168, %c0_169] : memref<2x32xf32, #tpu.memory_space<vmem>>, vector<2x32xf32>
    %370 = arith.truncf %369 : vector<2x32xf32> to vector<2x32xbf16>
    %cst_170 = arith.constant dense<0.000000e+00> : vector<2x128xf32>
    %371 = tpu.matmul %370, %4, %cst_170 {dimension_numbers = #tpu.dot_dimension_numbers<[1], [0], [0], [1], [0, 0, 1, 1], [], []>} : vector<2x32xbf16>, vector<32x128xbf16>, vector<2x128xf32> -> vector<2x128xf32>
    %372 = arith.addf %368, %371 : vector<2x128xf32>
    %373 = vector.extract_strided_slice %372 {offsets = [0, 0], sizes = [2, 32], strides = [1, 1]} : vector<2x128xf32> to vector<2x32xf32>
    %374 = arith.negf %373 : vector<2x32xf32>
    %375 = math.exp %374 : vector<2x32xf32>
    %cst_171 = arith.constant 1.000000e+00 : f32
    %376 = vector.broadcast %cst_171 : f32 to vector<2x32xf32>
    %377 = arith.addf %376, %375 : vector<2x32xf32>
    %378 = arith.divf %376, %377 : vector<2x32xf32>
    %379 = vector.extract_strided_slice %372 {offsets = [0, 32], sizes = [2, 32], strides = [1, 1]} : vector<2x128xf32> to vector<2x32xf32>
    %380 = arith.negf %379 : vector<2x32xf32>
    %381 = math.exp %380 : vector<2x32xf32>
    %cst_172 = arith.constant 1.000000e+00 : f32
    %382 = vector.broadcast %cst_172 : f32 to vector<2x32xf32>
    %383 = arith.addf %382, %381 : vector<2x32xf32>
    %384 = arith.divf %382, %383 : vector<2x32xf32>
    %385 = vector.extract_strided_slice %372 {offsets = [0, 64], sizes = [2, 32], strides = [1, 1]} : vector<2x128xf32> to vector<2x32xf32>
    %386 = math.tanh %385 : vector<2x32xf32>
    %387 = vector.extract_strided_slice %372 {offsets = [0, 96], sizes = [2, 32], strides = [1, 1]} : vector<2x128xf32> to vector<2x32xf32>
    %388 = arith.negf %387 : vector<2x32xf32>
    %389 = math.exp %388 : vector<2x32xf32>
    %cst_173 = arith.constant 1.000000e+00 : f32
    %390 = vector.broadcast %cst_173 : f32 to vector<2x32xf32>
    %391 = arith.addf %390, %389 : vector<2x32xf32>
    %392 = arith.divf %390, %391 : vector<2x32xf32>
    %c0_174 = arith.constant 0 : index
    %c0_175 = arith.constant 0 : index
    %393 = vector.load %arg13[%c0_174, %c0_175] : memref<2x32xf32, #tpu.memory_space<vmem>>, vector<2x32xf32>
    %394 = arith.mulf %384, %393 : vector<2x32xf32>
    %395 = arith.mulf %378, %386 : vector<2x32xf32>
    %396 = arith.addf %394, %395 : vector<2x32xf32>
    %397 = math.tanh %396 : vector<2x32xf32>
    %398 = arith.mulf %392, %397 : vector<2x32xf32>
    %c0_176 = arith.constant 0 : index
    %c0_177 = arith.constant 0 : index
    %399 = vector.load %arg13[%c0_176, %c0_177] : memref<2x32xf32, #tpu.memory_space<vmem>>, vector<2x32xf32>
    tpu.vector_store %arg13[%c0_176, %c0_177], %396 {strides = array<i32>} : memref<2x32xf32, #tpu.memory_space<vmem>>, vector<2x32xf32>,
    %c0_178 = arith.constant 0 : index
    %c0_179 = arith.constant 0 : index
    %400 = vector.load %arg12[%c0_178, %c0_179] : memref<2x32xf32, #tpu.memory_space<vmem>>, vector<2x32xf32>
    tpu.vector_store %arg12[%c0_178, %c0_179], %398 {strides = array<i32>} : memref<2x32xf32, #tpu.memory_space<vmem>>, vector<2x32xf32>,
    %401 = arith.truncf %398 : vector<2x32xf32> to vector<2x32xbf16>
    %402 = arith.index_cast %c7_i32_165 : i32 to index
    %c0_180 = arith.constant 0 : index
    %c0_181 = arith.constant 0 : index
    %403 = vector.load %arg8[%402, %c0_180, %c0_181] : memref<8x2x32xbf16, #tpu.memory_space<vmem>>, vector<1x2x32xbf16>
    %404 = vector.shape_cast %403 : vector<1x2x32xbf16> to vector<2x32xbf16>
    %405 = vector.shape_cast %401 : vector<2x32xbf16> to vector<1x2x32xbf16>
    tpu.vector_store %arg8[%402, %c0_180, %c0_181], %405 {strides = array<i32>} : memref<8x2x32xbf16, #tpu.memory_space<vmem>>, vector<1x2x32xbf16>,
    %c8_i32_182 = arith.constant 8 : i32
    %c0_i32_183 = arith.constant 0 : i32
    %406 = arith.cmpi eq, %arg1, %c0_i32_183 : i32
    %407 = arith.extui %406 : i1 to i32
    %c0_i32_184 = arith.constant 0 : i32
    %408 = arith.cmpi ne, %407, %c0_i32_184 : i32
    scf.if %408 {
      %c0_185 = arith.constant 0 : index
      %c0_186 = arith.constant 0 : index
      %409 = vector.load %arg12[%c0_185, %c0_186] : memref<2x32xf32, #tpu.memory_space<vmem>>, vector<2x32xf32>
      %c0_187 = arith.constant 0 : index
      %c0_188 = arith.constant 0 : index
      %410 = vector.load %arg9[%c0_187, %c0_188] : memref<2x32xf32, #tpu.memory_space<vmem>>, vector<2x32xf32>
      tpu.vector_store %arg9[%c0_187, %c0_188], %409 {strides = array<i32>} : memref<2x32xf32, #tpu.memory_space<vmem>>, vector<2x32xf32>,
      %c0_189 = arith.constant 0 : index
      %c0_190 = arith.constant 0 : index
      %411 = vector.load %arg13[%c0_189, %c0_190] : memref<2x32xf32, #tpu.memory_space<vmem>>, vector<2x32xf32>
      %c0_191 = arith.constant 0 : index
      %c0_192 = arith.constant 0 : index
      %412 = vector.load %arg10[%c0_191, %c0_192] : memref<2x32xf32, #tpu.memory_space<vmem>>, vector<2x32xf32>
      tpu.vector_store %arg10[%c0_191, %c0_192], %411 {strides = array<i32>} : memref<2x32xf32, #tpu.memory_space<vmem>>, vector<2x32xf32>,
    } else {
    }
    return
  }
  func.func @transform_0(%arg0: i32, %arg1: i32) -> (i32, i32, i32) {
    %c0_i32 = arith.constant 0 : i32
    %c0_i32_0 = arith.constant 0 : i32
    return %arg1, %arg0, %c0_i32 : i32, i32, i32
  }
  func.func @transform_1(%arg0: i32, %arg1: i32) -> (i32, i32) {
    %c0_i32 = arith.constant 0 : i32
    %c0_i32_0 = arith.constant 0 : i32
    %c0_i32_1 = arith.constant 0 : i32
    return %c0_i32, %c0_i32_0 : i32, i32
  }
  func.func @transform_2(%arg0: i32, %arg1: i32) -> (i32, i32) {
    %c0_i32 = arith.constant 0 : i32
    %c0_i32_0 = arith.constant 0 : i32
    %c0_i32_1 = arith.constant 0 : i32
    return %c0_i32, %c0_i32_0 : i32, i32
  }
  func.func @transform_3(%arg0: i32, %arg1: i32) -> (i32, i32) {
    %c0_i32 = arith.constant 0 : i32
    %c0_i32_0 = arith.constant 0 : i32
    %c0_i32_1 = arith.constant 0 : i32
    return %c0_i32, %c0_i32_0 : i32, i32
  }
  func.func @transform_4(%arg0: i32, %arg1: i32) -> (i32, i32) {
    %c0_i32 = arith.constant 0 : i32
    %c0_i32_0 = arith.constant 0 : i32
    return %arg0, %c0_i32 : i32, i32
  }
  func.func @transform_5(%arg0: i32, %arg1: i32) -> (i32, i32) {
    %c0_i32 = arith.constant 0 : i32
    %c0_i32_0 = arith.constant 0 : i32
    return %arg0, %c0_i32 : i32, i32
  }
  func.func @transform_6(%arg0: i32, %arg1: i32) -> (i32, i32, i32) {
    %c0_i32 = arith.constant 0 : i32
    %c0_i32_0 = arith.constant 0 : i32
    return %arg1, %arg0, %c0_i32 : i32, i32, i32
  }
  func.func @transform_7(%arg0: i32, %arg1: i32) -> (i32, i32) {
    %c0_i32 = arith.constant 0 : i32
    %c0_i32_0 = arith.constant 0 : i32
    return %arg0, %c0_i32 : i32, i32
  }
  func.func @transform_8(%arg0: i32, %arg1: i32) -> (i32, i32) {
    %c0_i32 = arith.constant 0 : i32
    %c0_i32_0 = arith.constant 0 : i32
    return %arg0, %c0_i32 : i32, i32
  }
}

</mosaic_0001>

<llo_original>
// kernel: tpu_custom_call.1
$region0: #{tpu_custom_call.1}
  #allocation0 [shape = 'u32[]', space=smem, size = 0x4, offset = 0x4, fixed_abs, tag = 'smem constant byte address 0x4 - core index']
  #allocation1 [shape = 'u32[144,128]{1,0:T(1,128)}', space=vmem, size = 0x12000, scoped, tag = 'internal scratch']
  #allocation2 [shape = 'f32[8,2,128]{2,1,0:T(2,128)}', space=vmem, size = 0x2000, scoped, tag = 'scratch operand']
  #allocation3 [shape = 'f32[2,32]{1,0:T(2,128)}', space=vmem, size = 0x400, scoped, tag = 'scratch operand']
  #allocation4 [shape = 'f32[2,32]{1,0:T(2,128)}', space=vmem, size = 0x400, scoped, tag = 'scratch operand']
  %s0 = inlined_call_operand.hbm [shape: bf16[8,2,16], index: 0, kind: input, shape index: {}]
  %s1 = inlined_call_operand.hbm [shape: bf16[16,128], index: 1, kind: input, shape index: {}]
  %s2 = inlined_call_operand.hbm [shape: f32[1,128], index: 2, kind: input, shape index: {}]
  %s3 = inlined_call_operand.hbm [shape: bf16[32,128], index: 3, kind: input, shape index: {}]
  %s4 = inlined_call_operand.hbm [shape: f32[2,32], index: 4, kind: input, shape index: {}]
  %s5 = inlined_call_operand.hbm [shape: f32[2,32], index: 5, kind: input, shape index: {}]
  %s6 = inlined_call_operand.hbm [shape: bf16[8,2,32], index: 6, kind: output, shape index: {0}]
  %s7 = inlined_call_operand.hbm [shape: f32[2,32], index: 7, kind: output, shape index: {1}]
  %s8 = inlined_call_operand.hbm [shape: f32[2,32], index: 8, kind: output, shape index: {2}]
  %9 = xla_tuple %s6, %s7, %s8
  %s10 = sld [smem:[#allocation0]]
  $region82: #{tpu_custom_call.1} parent=0
    _
  %s12 = ssub.s32 1, %s10
  %s13 = scalar_select 0, %s12, %s10
  $region1: #{tpu_custom_call.1} parent=0
    #allocation5 [shape = 'u8[4096]{0}', space=vmem, size = 0x1000, scoped, tag = 'input window, operand 0, single buffered']
    #allocation6 [shape = 's32[1]{0}', space=sflag, size = 0x4, scoped, tag = 'scoped memory for tpu_custom_call.1']
    #allocation7 [shape = 's32[1]{0}', space=sflag, size = 0x4, scoped, tag = 'scoped memory for tpu_custom_call.1']
    #allocation8 [shape = 'u8[4096]{0}', space=vmem, size = 0x1000, scoped, tag = 'input window, operand 1, single buffered']
    #allocation9 [shape = 's32[1]{0}', space=sflag, size = 0x4, scoped, tag = 'scoped memory for tpu_custom_call.1']
    #allocation10 [shape = 'u8[512]{0}', space=vmem, size = 0x400, scoped, tag = 'input window, operand 2, single buffered']
    #allocation11 [shape = 'u8[8192]{0}', space=vmem, size = 0x2000, scoped, tag = 'input window, operand 3, single buffered']
    #allocation12 [shape = 's32[1]{0}', space=sflag, size = 0x4, scoped, tag = 'scoped memory for tpu_custom_call.1']
    #allocation13 [shape = 'u8[1024]{0}', space=vmem, size = 0x400, scoped, tag = 'input window, operand 4, single buffered']
    #allocation14 [shape = 'u8[1024]{0}', space=vmem, size = 0x400, scoped, tag = 'input window, operand 5, single buffered']
    #allocation15 [shape = 's32[1]{0}', space=sflag, size = 0x4, scoped, tag = 'scoped memory for tpu_custom_call.1']
    #allocation16 [shape = 'u8[4096]{0}', space=vmem, size = 0x1000, scoped, tag = 'output window, operand 0, single buffered']
    #allocation17 [shape = 'u8[1024]{0}', space=vmem, size = 0x400, scoped, tag = 'output window, operand 1, single buffered']
    #allocation18 [shape = 's32[1]{0}', space=sflag, size = 0x4, scoped, tag = 'scoped memory for tpu_custom_call.1']
    #allocation19 [shape = 'u8[1024]{0}', space=vmem, size = 0x400, scoped, tag = 'output window, operand 2, single buffered']
    %14 = vsyncpa [#allocation6], 0
    %15 = vsyncpa [#allocation9], 0
    %16 = vsyncpa [#allocation12], 0
    %17 = vsyncpa [#allocation15], 0
    %18 = vsyncpa [#allocation7], 0
    %19 = vsyncpa [#allocation18], 0
    // Predicated region
    $region2: #{tpu_custom_call.1} parent=1 // pred_check
      _
    $region3: #{tpu_custom_call.1} parent=1 // pred_check_branch
      %21 = sbr.rel (0) target = $region5
    $region4: #{tpu_custom_call.1} parent=1 // pred_region
      %s23 = ssub.s32 128, 128
      %24 = vsyncadd [#allocation6], %s23
      %s25 = sshll.u32 [#allocation5], 4
      %s26 = int_to_ptr.vmem [resolvable:$true] %s25
      %31 = dma.hbm_to_vmem [thread:$0]  %s0, 128, %s26, [#allocation6], 16, 16, 1
    $region5: #{tpu_custom_call.1} parent=1 // pred_fallthru
      _
    // Predicated region
    $region6: #{tpu_custom_call.1} parent=1 // pred_check
      _
    $region7: #{tpu_custom_call.1} parent=1 // pred_check_branch
      %33 = sbr.rel (0) target = $region9
    $region8: #{tpu_custom_call.1} parent=1 // pred_region
      %s35 = ssub.s32 128, 128
      %36 = vsyncadd [#allocation9], %s35
      %s37 = sshll.u32 [#allocation8], 4
      %s38 = int_to_ptr.vmem [resolvable:$true] %s37
      %43 = dma.hbm_to_vmem [thread:$0]  %s1, 128, %s38, [#allocation9], 64, 64, 4
    $region9: #{tpu_custom_call.1} parent=1 // pred_fallthru
      _
    // Predicated region
    $region10: #{tpu_custom_call.1} parent=1 // pred_check
      _
    $region11: #{tpu_custom_call.1} parent=1 // pred_check_branch
      %45 = sbr.rel (0) target = $region13
    $region12: #{tpu_custom_call.1} parent=1 // pred_region
      %s47 = ssub.s32 16, 16
      %48 = vsyncadd [#allocation9], %s47
      %s50 = sshll.u32 [#allocation10], 4
      %s51 = int_to_ptr.vmem [resolvable:$true] %s50
      %53 = dma.hbm_to_vmem [thread:$0]  %s2, 16, %s51, [#allocation9]
    $region13: #{tpu_custom_call.1} parent=1 // pred_fallthru
      _
    // Predicated region
    $region14: #{tpu_custom_call.1} parent=1 // pred_check
      _
    $region15: #{tpu_custom_call.1} parent=1 // pred_check_branch
      %55 = sbr.rel (0) target = $region17
    $region16: #{tpu_custom_call.1} parent=1 // pred_region
      %s57 = ssub.s32 256, 256
      %58 = vsyncadd [#allocation12], %s57
      %s59 = sshll.u32 [#allocation11], 4
      %s60 = int_to_ptr.vmem [resolvable:$true] %s59
      %65 = dma.hbm_to_vmem [thread:$0]  %s3, 256, %s60, [#allocation12], 64, 64, 4
    $region17: #{tpu_custom_call.1} parent=1 // pred_fallthru
      _
    // Predicated region
    $region18: #{tpu_custom_call.1} parent=1 // pred_check
      _
    $region19: #{tpu_custom_call.1} parent=1 // pred_check_branch
      %67 = sbr.rel (0) target = $region21
    $region20: #{tpu_custom_call.1} parent=1 // pred_region
      %s69 = ssub.s32 32, 32
      %70 = vsyncadd [#allocation12], %s69
      %s72 = sshll.u32 [#allocation13], 4
      %s73 = int_to_ptr.vmem [resolvable:$true] %s72
      %75 = dma.hbm_to_vmem [thread:$0]  %s4, 32, %s73, [#allocation12]
    $region21: #{tpu_custom_call.1} parent=1 // pred_fallthru
      _
    // Predicated region
    $region22: #{tpu_custom_call.1} parent=1 // pred_check
      _
    $region23: #{tpu_custom_call.1} parent=1 // pred_check_branch
      %77 = sbr.rel (0) target = $region25
    $region24: #{tpu_custom_call.1} parent=1 // pred_region
      %s79 = ssub.s32 32, 32
      %80 = vsyncadd [#allocation15], %s79
      %s82 = sshll.u32 [#allocation14], 4
      %s83 = int_to_ptr.vmem [resolvable:$true] %s82
      %85 = dma.hbm_to_vmem [thread:$0]  %s5, 32, %s83, [#allocation15]
    $region25: #{tpu_custom_call.1} parent=1 // pred_fallthru
      _
    // Predicated region
    $region26: #{tpu_custom_call.1} parent=1 // pred_check
      _
    $region27: #{tpu_custom_call.1} parent=1 // pred_check_branch
      %87 = sbr.rel (0) target = $region29
    $region28: #{tpu_custom_call.1} parent=1 // pred_region
      %88 = dma.done [#allocation6], 128
    $region29: #{tpu_custom_call.1} parent=1 // pred_fallthru
      _
    // Predicated region
    $region30: #{tpu_custom_call.1} parent=1 // pred_check
      _
    $region31: #{tpu_custom_call.1} parent=1 // pred_check_branch
      %90 = sbr.rel (0) target = $region33
    $region32: #{tpu_custom_call.1} parent=1 // pred_region
      %91 = dma.done [#allocation9], 128
    $region33: #{tpu_custom_call.1} parent=1 // pred_fallthru
      _
    // Predicated region
    $region34: #{tpu_custom_call.1} parent=1 // pred_check
      _
    $region35: #{tpu_custom_call.1} parent=1 // pred_check_branch
      %93 = sbr.rel (0) target = $region37
    $region36: #{tpu_custom_call.1} parent=1 // pred_region
      %94 = dma.done [#allocation9], 16
    $region37: #{tpu_custom_call.1} parent=1 // pred_fallthru
      _
    // Predicated region
    $region38: #{tpu_custom_call.1} parent=1 // pred_check
      _
    $region39: #{tpu_custom_call.1} parent=1 // pred_check_branch
      %96 = sbr.rel (0) target = $region41
    $region40: #{tpu_custom_call.1} parent=1 // pred_region
      %97 = dma.done [#allocation12], 256
    $region41: #{tpu_custom_call.1} parent=1 // pred_fallthru
      _
    // Predicated region
    $region42: #{tpu_custom_call.1} parent=1 // pred_check
      _
    $region43: #{tpu_custom_call.1} parent=1 // pred_check_branch
      %99 = sbr.rel (0) target = $region45
    $region44: #{tpu_custom_call.1} parent=1 // pred_region
      %100 = dma.done [#allocation12], 32
    $region45: #{tpu_custom_call.1} parent=1 // pred_fallthru
      _
    // Predicated region
    $region46: #{tpu_custom_call.1} parent=1 // pred_check
      _
    $region47: #{tpu_custom_call.1} parent=1 // pred_check_branch
      %102 = sbr.rel (0) target = $region49
    $region48: #{tpu_custom_call.1} parent=1 // pred_region
      %103 = dma.done [#allocation15], 32
    $region49: #{tpu_custom_call.1} parent=1 // pred_fallthru
      _
    %p105 = scmp.eq.s32.totalorder 0, 0
    // Predicated region
    $region50: #{tpu_custom_call.1} parent=1 // pred_check
      %p106 = pneg %p105
    $region51: #{tpu_custom_call.1} parent=1 // pred_check_branch
      %108 = sbr.rel (%p106) target = $region53
    $region52: #{tpu_custom_call.1} parent=1 // pred_region
      %v109 = vld [vmem:[#allocation13] sm:$0x3]
      %vm110 = vcmask 254976
      %111 = vst.msk [vmem:[#allocation3] sm:$0x3] %vm110, %v109
      %v112 = vld [vmem:[#allocation14] sm:$0x3]
      %113 = vst.msk [vmem:[#allocation4] sm:$0x3] %vm110, %v112
    $region53: #{tpu_custom_call.1} parent=1 // pred_fallthru
      _
    %v114 = vld [vmem:[#allocation8] sm:$0xf]
    %v115 = vld [vmem:[#allocation8 + $0x4] sm:$0xf]
    %v116 = vld [vmem:[#allocation11] sm:$0xf]
    %v117 = vld [vmem:[#allocation11 + $0x4] sm:$0xf]
    %v118 = vld [vmem:[#allocation11 + $0x8] sm:$0xf]
    %v119 = vld [vmem:[#allocation11 + $0xc] sm:$0xf]
    %v120 = vld [vmem:[#allocation10] sm:$0x1]
    %v121 = vld [vmem:[#allocation5] sm:$0x1]
    %v123 = vlaneseq
    %v124 = vshrl.u32 %v123, 7
    %v125 = vsub.s32 0, %v124
    %v126 = vrot.slane %v120, %v125
    %v130 = vunpack.c.l.b16 %v114
    %v131 = vunpack.c.l.b16 %v115
    %v132 = vpack.c.b16 %v131, %v130
    %vm134 = vcmask 130048
    %v136 = vsel %vm134, %v121, 0
    %138 = vmatprep.subr.bf16.mxu0 0
    %139 = vmatpush1.bf16.msra.mxu0 %v132
    %140 = vmatprep.subr.bf16.mxu0 0
    %141 = vmatpush1.bf16.msra.mxu0 0
    %142 = vmatprep.subr.bf16.mxu0 0
    %143 = vmatpush1.bf16.msra.mxu0 0
    %144 = vmatprep.subr.bf16.mxu0 0
    %145 = vmatpush1.bf16.msra.mxu0 0
    %146 = vmatprep.subr.bf16.mxu0 0
    %147 = vmatpush1.bf16.msra.mxu0 0
    %148 = vmatprep.subr.bf16.mxu0 0
    %149 = vmatpush1.bf16.msra.mxu0 0
    %150 = vmatprep.subr.bf16.mxu0 0
    %151 = vmatpush1.bf16.msra.mxu0 0
    %152 = vmatprep.subr.bf16.mxu0 0
    %153 = vmatpush1.bf16.msra.mxu0 0
    %154 = vmatprep.subr.bf16.mxu0 0
    %155 = vmatpush1.bf16.msra.mxu0 0
    %156 = vmatprep.subr.bf16.mxu0 0
    %157 = vmatpush1.bf16.msra.mxu0 0
    %158 = vmatprep.subr.bf16.mxu0 0
    %159 = vmatpush1.bf16.msra.mxu0 0
    %160 = vmatprep.subr.bf16.mxu0 0
    %161 = vmatpush1.bf16.msra.mxu0 0
    %162 = vmatprep.subr.bf16.mxu0 0
    %163 = vmatpush1.bf16.msra.mxu0 0
    %164 = vmatprep.subr.bf16.mxu0 0
    %165 = vmatpush1.bf16.msra.mxu0 0
    %166 = vmatprep.subr.bf16.mxu0 0
    %167 = vmatpush1.bf16.msra.mxu0 0
    %168 = vmatprep.subr.bf16.mxu0 0
    %169 = vmatpush1.bf16.msra.mxu0 0
    %170 = vmatprep.mubr.bf16.mxu0 0
    %171 = vmatmul.mubr.bf16.gmra.mrb[0].mxu0 %v136
    %v172 = vpop.f32.mrb[0].mxu0
    %v173 = vadd.f32 %v126, %v172
    %v174 = vpop.f32.mrb[0].mxu0
    %v175 = vpop.f32.mrb[0].mxu0
    %v176 = vpop.f32.mrb[0].mxu0
    %177 = vdwg.mxu0
    %178 = vst [vmem:[#allocation2] sm:$0x3] %v173
    %s179 = scalar_lea.vmem [#allocation5], 1
    %v180 = vld [vmem:[%s179] sm:$0x1]
    %v182 = vsel %vm134, %v180, 0
    %184 = vmatprep.subr.bf16.mxu0 0
    %185 = vmatpush1.bf16.msra.mxu0 %v132
    %186 = vmatprep.subr.bf16.mxu0 0
    %187 = vmatpush1.bf16.msra.mxu0 0
    %188 = vmatprep.subr.bf16.mxu0 0
    %189 = vmatpush1.bf16.msra.mxu0 0
    %190 = vmatprep.subr.bf16.mxu0 0
    %191 = vmatpush1.bf16.msra.mxu0 0
    %192 = vmatprep.subr.bf16.mxu0 0
    %193 = vmatpush1.bf16.msra.mxu0 0
    %194 = vmatprep.subr.bf16.mxu0 0
    %195 = vmatpush1.bf16.msra.mxu0 0
    %196 = vmatprep.subr.bf16.mxu0 0
    %197 = vmatpush1.bf16.msra.mxu0 0
    %198 = vmatprep.subr.bf16.mxu0 0
    %199 = vmatpush1.bf16.msra.mxu0 0
    %200 = vmatprep.subr.bf16.mxu0 0
    %201 = vmatpush1.bf16.msra.mxu0 0
    %202 = vmatprep.subr.bf16.mxu0 0
    %203 = vmatpush1.bf16.msra.mxu0 0
    %204 = vmatprep.subr.bf16.mxu0 0
    %205 = vmatpush1.bf16.msra.mxu0 0
    %206 = vmatprep.subr.bf16.mxu0 0
    %207 = vmatpush1.bf16.msra.mxu0 0
    %208 = vmatprep.subr.bf16.mxu0 0
    %209 = vmatpush1.bf16.msra.mxu0 0
    %210 = vmatprep.subr.bf16.mxu0 0
    %211 = vmatpush1.bf16.msra.mxu0 0
    %212 = vmatprep.subr.bf16.mxu0 0
    %213 = vmatpush1.bf16.msra.mxu0 0
    %214 = vmatprep.subr.bf16.mxu0 0
    %215 = vmatpush1.bf16.msra.mxu0 0
    %216 = vmatprep.mubr.bf16.mxu0 0
    %217 = vmatmul.mubr.bf16.gmra.mrb[0].mxu0 %v182
    %v218 = vpop.f32.mrb[0].mxu0
    %v219 = vadd.f32 %v126, %v218
    %v220 = vpop.f32.mrb[0].mxu0
    %v221 = vpop.f32.mrb[0].mxu0
    %v222 = vpop.f32.mrb[0].mxu0
    %223 = vdwg.mxu0
    %s224 = scalar_lea.vmem [#allocation2], 2
    %225 = vst [vmem:[%s224] sm:$0x3] %v219
    %s226 = scalar_lea.vmem [#allocation5], 2
    %v227 = vld [vmem:[%s226] sm:$0x1]
    %v229 = vsel %vm134, %v227, 0
    %231 = vmatprep.subr.bf16.mxu0 0
    %232 = vmatpush1.bf16.msra.mxu0 %v132
    %233 = vmatprep.subr.bf16.mxu0 0
    %234 = vmatpush1.bf16.msra.mxu0 0
    %235 = vmatprep.subr.bf16.mxu0 0
    %236 = vmatpush1.bf16.msra.mxu0 0
    %237 = vmatprep.subr.bf16.mxu0 0
    %238 = vmatpush1.bf16.msra.mxu0 0
    %239 = vmatprep.subr.bf16.mxu0 0
    %240 = vmatpush1.bf16.msra.mxu0 0
    %241 = vmatprep.subr.bf16.mxu0 0
    %242 = vmatpush1.bf16.msra.mxu0 0
    %243 = vmatprep.subr.bf16.mxu0 0
    %244 = vmatpush1.bf16.msra.mxu0 0
    %245 = vmatprep.subr.bf16.mxu0 0
    %246 = vmatpush1.bf16.msra.mxu0 0
    %247 = vmatprep.subr.bf16.mxu0 0
    %248 = vmatpush1.bf16.msra.mxu0 0
    %249 = vmatprep.subr.bf16.mxu0 0
    %250 = vmatpush1.bf16.msra.mxu0 0
    %251 = vmatprep.subr.bf16.mxu0 0
    %252 = vmatpush1.bf16.msra.mxu0 0
    %253 = vmatprep.subr.bf16.mxu0 0
    %254 = vmatpush1.bf16.msra.mxu0 0
    %255 = vmatprep.subr.bf16.mxu0 0
    %256 = vmatpush1.bf16.msra.mxu0 0
    %257 = vmatprep.subr.bf16.mxu0 0
    %258 = vmatpush1.bf16.msra.mxu0 0
    %259 = vmatprep.subr.bf16.mxu0 0
    %260 = vmatpush1.bf16.msra.mxu0 0
    %261 = vmatprep.subr.bf16.mxu0 0
    %262 = vmatpush1.bf16.msra.mxu0 0
    %263 = vmatprep.mubr.bf16.mxu0 0
    %264 = vmatmul.mubr.bf16.gmra.mrb[0].mxu0 %v229
    %v265 = vpop.f32.mrb[0].mxu0
    %v266 = vadd.f32 %v126, %v265
    %v267 = vpop.f32.mrb[0].mxu0
    %v268 = vpop.f32.mrb[0].mxu0
    %v269 = vpop.f32.mrb[0].mxu0
    %270 = vdwg.mxu0
    %s271 = scalar_lea.vmem [#allocation2], 4
    %272 = vst [vmem:[%s271] sm:$0x3] %v266
    %s273 = scalar_lea.vmem [#allocation5], 3
    %v274 = vld [vmem:[%s273] sm:$0x1]
    %v276 = vsel %vm134, %v274, 0
    %278 = vmatprep.subr.bf16.mxu0 0
    %279 = vmatpush1.bf16.msra.mxu0 %v132
    %280 = vmatprep.subr.bf16.mxu0 0
    %281 = vmatpush1.bf16.msra.mxu0 0
    %282 = vmatprep.subr.bf16.mxu0 0
    %283 = vmatpush1.bf16.msra.mxu0 0
    %284 = vmatprep.subr.bf16.mxu0 0
    %285 = vmatpush1.bf16.msra.mxu0 0
    %286 = vmatprep.subr.bf16.mxu0 0
    %287 = vmatpush1.bf16.msra.mxu0 0
    %288 = vmatprep.subr.bf16.mxu0 0
    %289 = vmatpush1.bf16.msra.mxu0 0
    %290 = vmatprep.subr.bf16.mxu0 0
    %291 = vmatpush1.bf16.msra.mxu0 0
    %292 = vmatprep.subr.bf16.mxu0 0
    %293 = vmatpush1.bf16.msra.mxu0 0
    %294 = vmatprep.subr.bf16.mxu0 0
    %295 = vmatpush1.bf16.msra.mxu0 0
    %296 = vmatprep.subr.bf16.mxu0 0
    %297 = vmatpush1.bf16.msra.mxu0 0
    %298 = vmatprep.subr.bf16.mxu0 0
    %299 = vmatpush1.bf16.msra.mxu0 0
    %300 = vmatprep.subr.bf16.mxu0 0
    %301 = vmatpush1.bf16.msra.mxu0 0
    %302 = vmatprep.subr.bf16.mxu0 0
    %303 = vmatpush1.bf16.msra.mxu0 0
    %304 = vmatprep.subr.bf16.mxu0 0
    %305 = vmatpush1.bf16.msra.mxu0 0
    %306 = vmatprep.subr.bf16.mxu0 0
    %307 = vmatpush1.bf16.msra.mxu0 0
    %308 = vmatprep.subr.bf16.mxu0 0
    %309 = vmatpush1.bf16.msra.mxu0 0
    %310 = vmatprep.mubr.bf16.mxu0 0
    %311 = vmatmul.mubr.bf16.gmra.mrb[0].mxu0 %v276
    %v312 = vpop.f32.mrb[0].mxu0
    %v313 = vadd.f32 %v126, %v312
    %v314 = vpop.f32.mrb[0].mxu0
    %v315 = vpop.f32.mrb[0].mxu0
    %v316 = vpop.f32.mrb[0].mxu0
    %317 = vdwg.mxu0
    %s318 = scalar_lea.vmem [#allocation2], 6
    %319 = vst [vmem:[%s318] sm:$0x3] %v313
    %s320 = scalar_lea.vmem [#allocation5], 4
    %v321 = vld [vmem:[%s320] sm:$0x1]
    %v323 = vsel %vm134, %v321, 0
    %325 = vmatprep.subr.bf16.mxu0 0
    %326 = vmatpush1.bf16.msra.mxu0 %v132
    %327 = vmatprep.subr.bf16.mxu0 0
    %328 = vmatpush1.bf16.msra.mxu0 0
    %329 = vmatprep.subr.bf16.mxu0 0
    %330 = vmatpush1.bf16.msra.mxu0 0
    %331 = vmatprep.subr.bf16.mxu0 0
    %332 = vmatpush1.bf16.msra.mxu0 0
    %333 = vmatprep.subr.bf16.mxu0 0
    %334 = vmatpush1.bf16.msra.mxu0 0
    %335 = vmatprep.subr.bf16.mxu0 0
    %336 = vmatpush1.bf16.msra.mxu0 0
    %337 = vmatprep.subr.bf16.mxu0 0
    %338 = vmatpush1.bf16.msra.mxu0 0
    %339 = vmatprep.subr.bf16.mxu0 0
    %340 = vmatpush1.bf16.msra.mxu0 0
    %341 = vmatprep.subr.bf16.mxu0 0
    %342 = vmatpush1.bf16.msra.mxu0 0
    %343 = vmatprep.subr.bf16.mxu0 0
    %344 = vmatpush1.bf16.msra.mxu0 0
    %345 = vmatprep.subr.bf16.mxu0 0
    %346 = vmatpush1.bf16.msra.mxu0 0
    %347 = vmatprep.subr.bf16.mxu0 0
    %348 = vmatpush1.bf16.msra.mxu0 0
    %349 = vmatprep.subr.bf16.mxu0 0
    %350 = vmatpush1.bf16.msra.mxu0 0
    %351 = vmatprep.subr.bf16.mxu0 0
    %352 = vmatpush1.bf16.msra.mxu0 0
    %353 = vmatprep.subr.bf16.mxu0 0
    %354 = vmatpush1.bf16.msra.mxu0 0
    %355 = vmatprep.subr.bf16.mxu0 0
    %356 = vmatpush1.bf16.msra.mxu0 0
    %357 = vmatprep.mubr.bf16.mxu0 0
    %358 = vmatmul.mubr.bf16.gmra.mrb[0].mxu0 %v323
    %v359 = vpop.f32.mrb[0].mxu0
    %v360 = vadd.f32 %v126, %v359
    %v361 = vpop.f32.mrb[0].mxu0
    %v362 = vpop.f32.mrb[0].mxu0
    %v363 = vpop.f32.mrb[0].mxu0
    %364 = vdwg.mxu0
    %s365 = scalar_lea.vmem [#allocation2], 8
    %366 = vst [vmem:[%s365] sm:$0x3] %v360
    %s367 = scalar_lea.vmem [#allocation5], 5
    %v368 = vld [vmem:[%s367] sm:$0x1]
    %v370 = vsel %vm134, %v368, 0
    %372 = vmatprep.subr.bf16.mxu0 0
    %373 = vmatpush1.bf16.msra.mxu0 %v132
    %374 = vmatprep.subr.bf16.mxu0 0
    %375 = vmatpush1.bf16.msra.mxu0 0
    %376 = vmatprep.subr.bf16.mxu0 0
    %377 = vmatpush1.bf16.msra.mxu0 0
    %378 = vmatprep.subr.bf16.mxu0 0
    %379 = vmatpush1.bf16.msra.mxu0 0
    %380 = vmatprep.subr.bf16.mxu0 0
    %381 = vmatpush1.bf16.msra.mxu0 0
    %382 = vmatprep.subr.bf16.mxu0 0
    %383 = vmatpush1.bf16.msra.mxu0 0
    %384 = vmatprep.subr.bf16.mxu0 0
    %385 = vmatpush1.bf16.msra.mxu0 0
    %386 = vmatprep.subr.bf16.mxu0 0
    %387 = vmatpush1.bf16.msra.mxu0 0
    %388 = vmatprep.subr.bf16.mxu0 0
    %389 = vmatpush1.bf16.msra.mxu0 0
    %390 = vmatprep.subr.bf16.mxu0 0
    %391 = vmatpush1.bf16.msra.mxu0 0
    %392 = vmatprep.subr.bf16.mxu0 0
    %393 = vmatpush1.bf16.msra.mxu0 0
    %394 = vmatprep.subr.bf16.mxu0 0
    %395 = vmatpush1.bf16.msra.mxu0 0
    %396 = vmatprep.subr.bf16.mxu0 0
    %397 = vmatpush1.bf16.msra.mxu0 0
    %398 = vmatprep.subr.bf16.mxu0 0
    %399 = vmatpush1.bf16.msra.mxu0 0
    %400 = vmatprep.subr.bf16.mxu0 0
    %401 = vmatpush1.bf16.msra.mxu0 0
    %402 = vmatprep.subr.bf16.mxu0 0
    %403 = vmatpush1.bf16.msra.mxu0 0
    %404 = vmatprep.mubr.bf16.mxu0 0
    %405 = vmatmul.mubr.bf16.gmra.mrb[0].mxu0 %v370
    %v406 = vpop.f32.mrb[0].mxu0
    %v407 = vadd.f32 %v126, %v406
    %v408 = vpop.f32.mrb[0].mxu0
    %v409 = vpop.f32.mrb[0].mxu0
    %v410 = vpop.f32.mrb[0].mxu0
    %411 = vdwg.mxu0
    %s412 = scalar_lea.vmem [#allocation2], 10
    %413 = vst [vmem:[%s412] sm:$0x3] %v407
    %s414 = scalar_lea.vmem [#allocation5], 6
    %v415 = vld [vmem:[%s414] sm:$0x1]
    %v417 = vsel %vm134, %v415, 0
    %419 = vmatprep.subr.bf16.mxu0 0
    %420 = vmatpush1.bf16.msra.mxu0 %v132
    %421 = vmatprep.subr.bf16.mxu0 0
    %422 = vmatpush1.bf16.msra.mxu0 0
    %423 = vmatprep.subr.bf16.mxu0 0
    %424 = vmatpush1.bf16.msra.mxu0 0
    %425 = vmatprep.subr.bf16.mxu0 0
    %426 = vmatpush1.bf16.msra.mxu0 0
    %427 = vmatprep.subr.bf16.mxu0 0
    %428 = vmatpush1.bf16.msra.mxu0 0
    %429 = vmatprep.subr.bf16.mxu0 0
    %430 = vmatpush1.bf16.msra.mxu0 0
    %431 = vmatprep.subr.bf16.mxu0 0
    %432 = vmatpush1.bf16.msra.mxu0 0
    %433 = vmatprep.subr.bf16.mxu0 0
    %434 = vmatpush1.bf16.msra.mxu0 0
    %435 = vmatprep.subr.bf16.mxu0 0
    %436 = vmatpush1.bf16.msra.mxu0 0
    %437 = vmatprep.subr.bf16.mxu0 0
    %438 = vmatpush1.bf16.msra.mxu0 0
    %439 = vmatprep.subr.bf16.mxu0 0
    %440 = vmatpush1.bf16.msra.mxu0 0
    %441 = vmatprep.subr.bf16.mxu0 0
    %442 = vmatpush1.bf16.msra.mxu0 0
    %443 = vmatprep.subr.bf16.mxu0 0
    %444 = vmatpush1.bf16.msra.mxu0 0
    %445 = vmatprep.subr.bf16.mxu0 0
    %446 = vmatpush1.bf16.msra.mxu0 0
    %447 = vmatprep.subr.bf16.mxu0 0
    %448 = vmatpush1.bf16.msra.mxu0 0
    %449 = vmatprep.subr.bf16.mxu0 0
    %450 = vmatpush1.bf16.msra.mxu0 0
    %451 = vmatprep.mubr.bf16.mxu0 0
    %452 = vmatmul.mubr.bf16.gmra.mrb[0].mxu0 %v417
    %v453 = vpop.f32.mrb[0].mxu0
    %v454 = vadd.f32 %v126, %v453
    %v455 = vpop.f32.mrb[0].mxu0
    %v456 = vpop.f32.mrb[0].mxu0
    %v457 = vpop.f32.mrb[0].mxu0
    %458 = vdwg.mxu0
    %s459 = scalar_lea.vmem [#allocation2], 12
    %460 = vst [vmem:[%s459] sm:$0x3] %v454
    %s461 = scalar_lea.vmem [#allocation5], 7
    %v462 = vld [vmem:[%s461] sm:$0x1]
    %v464 = vsel %vm134, %v462, 0
    %466 = vmatprep.subr.bf16.mxu0 0
    %467 = vmatpush1.bf16.msra.mxu0 %v132
    %468 = vmatprep.subr.bf16.mxu0 0
    %469 = vmatpush1.bf16.msra.mxu0 0
    %470 = vmatprep.subr.bf16.mxu0 0
    %471 = vmatpush1.bf16.msra.mxu0 0
    %472 = vmatprep.subr.bf16.mxu0 0
    %473 = vmatpush1.bf16.msra.mxu0 0
    %474 = vmatprep.subr.bf16.mxu0 0
    %475 = vmatpush1.bf16.msra.mxu0 0
    %476 = vmatprep.subr.bf16.mxu0 0
    %477 = vmatpush1.bf16.msra.mxu0 0
    %478 = vmatprep.subr.bf16.mxu0 0
    %479 = vmatpush1.bf16.msra.mxu0 0
    %480 = vmatprep.subr.bf16.mxu0 0
    %481 = vmatpush1.bf16.msra.mxu0 0
    %482 = vmatprep.subr.bf16.mxu0 0
    %483 = vmatpush1.bf16.msra.mxu0 0
    %484 = vmatprep.subr.bf16.mxu0 0
    %485 = vmatpush1.bf16.msra.mxu0 0
    %486 = vmatprep.subr.bf16.mxu0 0
    %487 = vmatpush1.bf16.msra.mxu0 0
    %488 = vmatprep.subr.bf16.mxu0 0
    %489 = vmatpush1.bf16.msra.mxu0 0
    %490 = vmatprep.subr.bf16.mxu0 0
    %491 = vmatpush1.bf16.msra.mxu0 0
    %492 = vmatprep.subr.bf16.mxu0 0
    %493 = vmatpush1.bf16.msra.mxu0 0
    %494 = vmatprep.subr.bf16.mxu0 0
    %495 = vmatpush1.bf16.msra.mxu0 0
    %496 = vmatprep.subr.bf16.mxu0 0
    %497 = vmatpush1.bf16.msra.mxu0 0
    %498 = vmatprep.mubr.bf16.mxu0 0
    %499 = vmatmul.mubr.bf16.gmra.mrb[0].mxu0 %v464
    %v500 = vpop.f32.mrb[0].mxu0
    %v501 = vadd.f32 %v126, %v500
    %v502 = vpop.f32.mrb[0].mxu0
    %v503 = vpop.f32.mrb[0].mxu0
    %v504 = vpop.f32.mrb[0].mxu0
    %505 = vdwg.mxu0
    %s506 = scalar_lea.vmem [#allocation2], 14
    %507 = vst [vmem:[%s506] sm:$0x3] %v501
    %v508 = vld [vmem:[#allocation2] sm:$0x3]
    %v509 = vld [vmem:[#allocation3] sm:$0x3]
    %v510 = vpack.c.bf16 %v509, %v509
    %v515 = vunpack.c.l.b16 %v116
    %v516 = vunpack.c.l.b16 %v117
    %v517 = vunpack.c.l.b16 %v118
    %v518 = vunpack.c.l.b16 %v119
    %v519 = vpack.c.b16 %v516, %v515
    %v520 = vpack.c.b16 %v518, %v517
    %vm523 = vcmask 261120
    %v525 = vsel %vm523, %v510, 0
    %527 = vmatprep.subr.bf16.mxu0 0
    %528 = vmatpush1.bf16.msra.mxu0 %v519
    %529 = vmatprep.subr.bf16.mxu0 0
    %530 = vmatpush1.bf16.msra.mxu0 %v520
    %531 = vmatprep.subr.bf16.mxu0 0
    %532 = vmatpush1.bf16.msra.mxu0 0
    %533 = vmatprep.subr.bf16.mxu0 0
    %534 = vmatpush1.bf16.msra.mxu0 0
    %535 = vmatprep.subr.bf16.mxu0 0
    %536 = vmatpush1.bf16.msra.mxu0 0
    %537 = vmatprep.subr.bf16.mxu0 0
    %538 = vmatpush1.bf16.msra.mxu0 0
    %539 = vmatprep.subr.bf16.mxu0 0
    %540 = vmatpush1.bf16.msra.mxu0 0
    %541 = vmatprep.subr.bf16.mxu0 0
    %542 = vmatpush1.bf16.msra.mxu0 0
    %543 = vmatprep.subr.bf16.mxu0 0
    %544 = vmatpush1.bf16.msra.mxu0 0
    %545 = vmatprep.subr.bf16.mxu0 0
    %546 = vmatpush1.bf16.msra.mxu0 0
    %547 = vmatprep.subr.bf16.mxu0 0
    %548 = vmatpush1.bf16.msra.mxu0 0
    %549 = vmatprep.subr.bf16.mxu0 0
    %550 = vmatpush1.bf16.msra.mxu0 0
    %551 = vmatprep.subr.bf16.mxu0 0
    %552 = vmatpush1.bf16.msra.mxu0 0
    %553 = vmatprep.subr.bf16.mxu0 0
    %554 = vmatpush1.bf16.msra.mxu0 0
    %555 = vmatprep.subr.bf16.mxu0 0
    %556 = vmatpush1.bf16.msra.mxu0 0
    %557 = vmatprep.subr.bf16.mxu0 0
    %558 = vmatpush1.bf16.msra.mxu0 0
    %559 = vmatprep.mubr.bf16.mxu0 0
    %560 = vmatmul.mubr.bf16.gmra.mrb[0].mxu0 %v525
    %v561 = vpop.f32.mrb[0].mxu0
    %v562 = vadd.f32 0.0, %v561
    %v563 = vpop.f32.mrb[0].mxu0
    %v564 = vpop.f32.mrb[0].mxu0
    %v565 = vpop.f32.mrb[0].mxu0
    %566 = vdwg.mxu0
    %v567 = vadd.f32 %v508, %v562
    %v568 = vxor.u32 %v567, 2147483648
    %v569 = vmul.f32 %v568, 1.442695
    %v570 = vpow.pop %v569
    %v571 = vadd.f32 %v570, 1.0
    %v572 = vrcp.pop %v571
    %v573 = vmul.f32 1.0, %v572
    %v574 = vtanh.pop %v567
    %v575 = vld [vmem:[#allocation4] sm:$0x3]
    %577 = vrot.lane.b32.xlu0 %v575, 32
    %v578 = vpop.permute.xlu0 %577
    %v580 = vmul.f32 %v573, %v578
    %582 = vrot.lane.b32.xlu0 %v574, 64
    %v583 = vpop.permute.xlu0 %582
    %v585 = vmul.f32 %v573, %v583
    %587 = vrot.lane.b32.xlu0 %v585, 32
    %v588 = vpop.permute.xlu0 %587
    %v590 = vadd.f32 %v580, %v588
    %v591 = vtanh.pop %v590
    %593 = vrot.lane.b32.xlu0 %v591, 64
    %v594 = vpop.permute.xlu0 %593
    %v596 = vmul.f32 %v573, %v594
    %598 = vrot.lane.b32.xlu0 %v590, 96
    %v599 = vpop.permute.xlu0 %598
    %vm601 = vcmask 254976
    %602 = vst.msk [vmem:[#allocation4] sm:$0x3] %vm601, %v599
    %604 = vrot.lane.b32.xlu0 %v596, 32
    %v605 = vpop.permute.xlu0 %604
    %607 = vst.msk [vmem:[#allocation3] sm:$0x3] %vm601, %v605
    %v608 = vpack.c.bf16 %v596, %v596
    %v611 = vunpack.c.l.s4 1966171168
    %v612 = vunpack.c.0.s8 %v611
    %v613 = vlaneseq
    %v614 = vshrl.u32 %v613, 7
    %v615 = vsub.s32 %v612, %v614
    %v616 = vrot.slane %v608, %v615
    %v618 = vunpack.c.l.s4 1966171168
    %v619 = vunpack.c.0.s8 %v618
    %v620 = vlaneseq
    %v621 = vshrl.u32 %v620, 7
    %v622 = vsub.s32 %v619, %v621
    %v623 = vrot.slane %v616, %v622
    %624 = vrot.lane.b32.xlu0 %v623, 32
    %v625 = vpop.permute.xlu0 %624
    %vm627 = vcmask 253952
    %628 = vst.msk [vmem:[#allocation16] sm:$0x1] %vm627, %v625
    %v629 = vld [vmem:[%s224] sm:$0x3]
    %v630 = vld [vmem:[#allocation3] sm:$0x3]
    %v631 = vpack.c.bf16 %v630, %v630
    %v633 = vsel %vm523, %v631, 0
    %635 = vmatprep.subr.bf16.mxu0 0
    %636 = vmatpush1.bf16.msra.mxu0 %v519
    %637 = vmatprep.subr.bf16.mxu0 0
    %638 = vmatpush1.bf16.msra.mxu0 %v520
    %639 = vmatprep.subr.bf16.mxu0 0
    %640 = vmatpush1.bf16.msra.mxu0 0
    %641 = vmatprep.subr.bf16.mxu0 0
    %642 = vmatpush1.bf16.msra.mxu0 0
    %643 = vmatprep.subr.bf16.mxu0 0
    %644 = vmatpush1.bf16.msra.mxu0 0
    %645 = vmatprep.subr.bf16.mxu0 0
    %646 = vmatpush1.bf16.msra.mxu0 0
    %647 = vmatprep.subr.bf16.mxu0 0
    %648 = vmatpush1.bf16.msra.mxu0 0
    %649 = vmatprep.subr.bf16.mxu0 0
    %650 = vmatpush1.bf16.msra.mxu0 0
    %651 = vmatprep.subr.bf16.mxu0 0
    %652 = vmatpush1.bf16.msra.mxu0 0
    %653 = vmatprep.subr.bf16.mxu0 0
    %654 = vmatpush1.bf16.msra.mxu0 0
    %655 = vmatprep.subr.bf16.mxu0 0
    %656 = vmatpush1.bf16.msra.mxu0 0
    %657 = vmatprep.subr.bf16.mxu0 0
    %658 = vmatpush1.bf16.msra.mxu0 0
    %659 = vmatprep.subr.bf16.mxu0 0
    %660 = vmatpush1.bf16.msra.mxu0 0
    %661 = vmatprep.subr.bf16.mxu0 0
    %662 = vmatpush1.bf16.msra.mxu0 0
    %663 = vmatprep.subr.bf16.mxu0 0
    %664 = vmatpush1.bf16.msra.mxu0 0
    %665 = vmatprep.subr.bf16.mxu0 0
    %666 = vmatpush1.bf16.msra.mxu0 0
    %667 = vmatprep.mubr.bf16.mxu0 0
    %668 = vmatmul.mubr.bf16.gmra.mrb[0].mxu0 %v633
    %v669 = vpop.f32.mrb[0].mxu0
    %v670 = vadd.f32 0.0, %v669
    %v671 = vpop.f32.mrb[0].mxu0
    %v672 = vpop.f32.mrb[0].mxu0
    %v673 = vpop.f32.mrb[0].mxu0
    %674 = vdwg.mxu0
    %v675 = vadd.f32 %v629, %v670
    %v676 = vxor.u32 %v675, 2147483648
    %v677 = vmul.f32 %v676, 1.442695
    %v678 = vpow.pop %v677
    %v679 = vadd.f32 %v678, 1.0
    %v680 = vrcp.pop %v679
    %v681 = vmul.f32 1.0, %v680
    %v682 = vtanh.pop %v675
    %v683 = vld [vmem:[#allocation4] sm:$0x3]
    %685 = vrot.lane.b32.xlu0 %v683, 32
    %v686 = vpop.permute.xlu0 %685
    %v688 = vmul.f32 %v681, %v686
    %690 = vrot.lane.b32.xlu0 %v682, 64
    %v691 = vpop.permute.xlu0 %690
    %v693 = vmul.f32 %v681, %v691
    %695 = vrot.lane.b32.xlu0 %v693, 32
    %v696 = vpop.permute.xlu0 %695
    %v698 = vadd.f32 %v688, %v696
    %v699 = vtanh.pop %v698
    %701 = vrot.lane.b32.xlu0 %v699, 64
    %v702 = vpop.permute.xlu0 %701
    %v704 = vmul.f32 %v681, %v702
    %706 = vrot.lane.b32.xlu0 %v698, 96
    %v707 = vpop.permute.xlu0 %706
    %709 = vst.msk [vmem:[#allocation4] sm:$0x3] %vm601, %v707
    %711 = vrot.lane.b32.xlu0 %v704, 32
    %v712 = vpop.permute.xlu0 %711
    %714 = vst.msk [vmem:[#allocation3] sm:$0x3] %vm601, %v712
    %v715 = vpack.c.bf16 %v704, %v704
    %v718 = vunpack.c.l.s4 1966171168
    %v719 = vunpack.c.0.s8 %v718
    %v720 = vlaneseq
    %v721 = vshrl.u32 %v720, 7
    %v722 = vsub.s32 %v719, %v721
    %v723 = vrot.slane %v715, %v722
    %v725 = vunpack.c.l.s4 1966171168
    %v726 = vunpack.c.0.s8 %v725
    %v727 = vlaneseq
    %v728 = vshrl.u32 %v727, 7
    %v729 = vsub.s32 %v726, %v728
    %v730 = vrot.slane %v723, %v729
    %731 = vrot.lane.b32.xlu0 %v730, 32
    %v732 = vpop.permute.xlu0 %731
    %s734 = scalar_lea.vmem [#allocation16], 1
    %735 = vst.msk [vmem:[%s734] sm:$0x1] %vm627, %v732
    %v736 = vld [vmem:[%s271] sm:$0x3]
    %v737 = vld [vmem:[#allocation3] sm:$0x3]
    %v738 = vpack.c.bf16 %v737, %v737
    %v740 = vsel %vm523, %v738, 0
    %742 = vmatprep.subr.bf16.mxu0 0
    %743 = vmatpush1.bf16.msra.mxu0 %v519
    %744 = vmatprep.subr.bf16.mxu0 0
    %745 = vmatpush1.bf16.msra.mxu0 %v520
    %746 = vmatprep.subr.bf16.mxu0 0
    %747 = vmatpush1.bf16.msra.mxu0 0
    %748 = vmatprep.subr.bf16.mxu0 0
    %749 = vmatpush1.bf16.msra.mxu0 0
    %750 = vmatprep.subr.bf16.mxu0 0
    %751 = vmatpush1.bf16.msra.mxu0 0
    %752 = vmatprep.subr.bf16.mxu0 0
    %753 = vmatpush1.bf16.msra.mxu0 0
    %754 = vmatprep.subr.bf16.mxu0 0
    %755 = vmatpush1.bf16.msra.mxu0 0
    %756 = vmatprep.subr.bf16.mxu0 0
    %757 = vmatpush1.bf16.msra.mxu0 0
    %758 = vmatprep.subr.bf16.mxu0 0
    %759 = vmatpush1.bf16.msra.mxu0 0
    %760 = vmatprep.subr.bf16.mxu0 0
    %761 = vmatpush1.bf16.msra.mxu0 0
    %762 = vmatprep.subr.bf16.mxu0 0
    %763 = vmatpush1.bf16.msra.mxu0 0
    %764 = vmatprep.subr.bf16.mxu0 0
    %765 = vmatpush1.bf16.msra.mxu0 0
    %766 = vmatprep.subr.bf16.mxu0 0
    %767 = vmatpush1.bf16.msra.mxu0 0
    %768 = vmatprep.subr.bf16.mxu0 0
    %769 = vmatpush1.bf16.msra.mxu0 0
    %770 = vmatprep.subr.bf16.mxu0 0
    %771 = vmatpush1.bf16.msra.mxu0 0
    %772 = vmatprep.subr.bf16.mxu0 0
    %773 = vmatpush1.bf16.msra.mxu0 0
    %774 = vmatprep.mubr.bf16.mxu0 0
    %775 = vmatmul.mubr.bf16.gmra.mrb[0].mxu0 %v740
    %v776 = vpop.f32.mrb[0].mxu0
    %v777 = vadd.f32 0.0, %v776
    %v778 = vpop.f32.mrb[0].mxu0
    %v779 = vpop.f32.mrb[0].mxu0
    %v780 = vpop.f32.mrb[0].mxu0
    %781 = vdwg.mxu0
    %v782 = vadd.f32 %v736, %v777
    %v783 = vxor.u32 %v782, 2147483648
    %v784 = vmul.f32 %v783, 1.442695
    %v785 = vpow.pop %v784
    %v786 = vadd.f32 %v785, 1.0
    %v787 = vrcp.pop %v786
    %v788 = vmul.f32 1.0, %v787
    %v789 = vtanh.pop %v782
    %v790 = vld [vmem:[#allocation4] sm:$0x3]
    %792 = vrot.lane.b32.xlu0 %v790, 32
    %v793 = vpop.permute.xlu0 %792
    %v795 = vmul.f32 %v788, %v793
    %797 = vrot.lane.b32.xlu0 %v789, 64
    %v798 = vpop.permute.xlu0 %797
    %v800 = vmul.f32 %v788, %v798
    %802 = vrot.lane.b32.xlu0 %v800, 32
    %v803 = vpop.permute.xlu0 %802
    %v805 = vadd.f32 %v795, %v803
    %v806 = vtanh.pop %v805
    %808 = vrot.lane.b32.xlu0 %v806, 64
    %v809 = vpop.permute.xlu0 %808
    %v811 = vmul.f32 %v788, %v809
    %813 = vrot.lane.b32.xlu0 %v805, 96
    %v814 = vpop.permute.xlu0 %813
    %816 = vst.msk [vmem:[#allocation4] sm:$0x3] %vm601, %v814
    %818 = vrot.lane.b32.xlu0 %v811, 32
    %v819 = vpop.permute.xlu0 %818
    %821 = vst.msk [vmem:[#allocation3] sm:$0x3] %vm601, %v819
    %v822 = vpack.c.bf16 %v811, %v811
    %v825 = vunpack.c.l.s4 1966171168
    %v826 = vunpack.c.0.s8 %v825
    %v827 = vlaneseq
    %v828 = vshrl.u32 %v827, 7
    %v829 = vsub.s32 %v826, %v828
    %v830 = vrot.slane %v822, %v829
    %v832 = vunpack.c.l.s4 1966171168
    %v833 = vunpack.c.0.s8 %v832
    %v834 = vlaneseq
    %v835 = vshrl.u32 %v834, 7
    %v836 = vsub.s32 %v833, %v835
    %v837 = vrot.slane %v830, %v836
    %838 = vrot.lane.b32.xlu0 %v837, 32
    %v839 = vpop.permute.xlu0 %838
    %s841 = scalar_lea.vmem [#allocation16], 2
    %842 = vst.msk [vmem:[%s841] sm:$0x1] %vm627, %v839
    %v843 = vld [vmem:[%s318] sm:$0x3]
    %v844 = vld [vmem:[#allocation3] sm:$0x3]
    %v845 = vpack.c.bf16 %v844, %v844
    %v847 = vsel %vm523, %v845, 0
    %849 = vmatprep.subr.bf16.mxu0 0
    %850 = vmatpush1.bf16.msra.mxu0 %v519
    %851 = vmatprep.subr.bf16.mxu0 0
    %852 = vmatpush1.bf16.msra.mxu0 %v520
    %853 = vmatprep.subr.bf16.mxu0 0
    %854 = vmatpush1.bf16.msra.mxu0 0
    %855 = vmatprep.subr.bf16.mxu0 0
    %856 = vmatpush1.bf16.msra.mxu0 0
    %857 = vmatprep.subr.bf16.mxu0 0
    %858 = vmatpush1.bf16.msra.mxu0 0
    %859 = vmatprep.subr.bf16.mxu0 0
    %860 = vmatpush1.bf16.msra.mxu0 0
    %861 = vmatprep.subr.bf16.mxu0 0
    %862 = vmatpush1.bf16.msra.mxu0 0
    %863 = vmatprep.subr.bf16.mxu0 0
    %864 = vmatpush1.bf16.msra.mxu0 0
    %865 = vmatprep.subr.bf16.mxu0 0
    %866 = vmatpush1.bf16.msra.mxu0 0
    %867 = vmatprep.subr.bf16.mxu0 0
    %868 = vmatpush1.bf16.msra.mxu0 0
    %869 = vmatprep.subr.bf16.mxu0 0
    %870 = vmatpush1.bf16.msra.mxu0 0
    %871 = vmatprep.subr.bf16.mxu0 0
    %872 = vmatpush1.bf16.msra.mxu0 0
    %873 = vmatprep.subr.bf16.mxu0 0
    %874 = vmatpush1.bf16.msra.mxu0 0
    %875 = vmatprep.subr.bf16.mxu0 0
    %876 = vmatpush1.bf16.msra.mxu0 0
    %877 = vmatprep.subr.bf16.mxu0 0
    %878 = vmatpush1.bf16.msra.mxu0 0
    %879 = vmatprep.subr.bf16.mxu0 0
    %880 = vmatpush1.bf16.msra.mxu0 0
    %881 = vmatprep.mubr.bf16.mxu0 0
    %882 = vmatmul.mubr.bf16.gmra.mrb[0].mxu0 %v847
    %v883 = vpop.f32.mrb[0].mxu0
    %v884 = vadd.f32 0.0, %v883
    %v885 = vpop.f32.mrb[0].mxu0
    %v886 = vpop.f32.mrb[0].mxu0
    %v887 = vpop.f32.mrb[0].mxu0
    %888 = vdwg.mxu0
    %v889 = vadd.f32 %v843, %v884
    %v890 = vxor.u32 %v889, 2147483648
    %v891 = vmul.f32 %v890, 1.442695
    %v892 = vpow.pop %v891
    %v893 = vadd.f32 %v892, 1.0
    %v894 = vrcp.pop %v893
    %v895 = vmul.f32 1.0, %v894
    %v896 = vtanh.pop %v889
    %v897 = vld [vmem:[#allocation4] sm:$0x3]
    %899 = vrot.lane.b32.xlu0 %v897, 32
    %v900 = vpop.permute.xlu0 %899
    %v902 = vmul.f32 %v895, %v900
    %904 = vrot.lane.b32.xlu0 %v896, 64
    %v905 = vpop.permute.xlu0 %904
    %v907 = vmul.f32 %v895, %v905
    %909 = vrot.lane.b32.xlu0 %v907, 32
    %v910 = vpop.permute.xlu0 %909
    %v912 = vadd.f32 %v902, %v910
    %v913 = vtanh.pop %v912
    %915 = vrot.lane.b32.xlu0 %v913, 64
    %v916 = vpop.permute.xlu0 %915
    %v918 = vmul.f32 %v895, %v916
    %920 = vrot.lane.b32.xlu0 %v912, 96
    %v921 = vpop.permute.xlu0 %920
    %923 = vst.msk [vmem:[#allocation4] sm:$0x3] %vm601, %v921
    %925 = vrot.lane.b32.xlu0 %v918, 32
    %v926 = vpop.permute.xlu0 %925
    %928 = vst.msk [vmem:[#allocation3] sm:$0x3] %vm601, %v926
    %v929 = vpack.c.bf16 %v918, %v918
    %v932 = vunpack.c.l.s4 1966171168
    %v933 = vunpack.c.0.s8 %v932
    %v934 = vlaneseq
    %v935 = vshrl.u32 %v934, 7
    %v936 = vsub.s32 %v933, %v935
    %v937 = vrot.slane %v929, %v936
    %v939 = vunpack.c.l.s4 1966171168
    %v940 = vunpack.c.0.s8 %v939
    %v941 = vlaneseq
    %v942 = vshrl.u32 %v941, 7
    %v943 = vsub.s32 %v940, %v942
    %v944 = vrot.slane %v937, %v943
    %945 = vrot.lane.b32.xlu0 %v944, 32
    %v946 = vpop.permute.xlu0 %945
    %s948 = scalar_lea.vmem [#allocation16], 3
    %949 = vst.msk [vmem:[%s948] sm:$0x1] %vm627, %v946
    %v950 = vld [vmem:[%s365] sm:$0x3]
    %v951 = vld [vmem:[#allocation3] sm:$0x3]
    %v952 = vpack.c.bf16 %v951, %v951
    %v954 = vsel %vm523, %v952, 0
    %956 = vmatprep.subr.bf16.mxu0 0
    %957 = vmatpush1.bf16.msra.mxu0 %v519
    %958 = vmatprep.subr.bf16.mxu0 0
    %959 = vmatpush1.bf16.msra.mxu0 %v520
    %960 = vmatprep.subr.bf16.mxu0 0
    %961 = vmatpush1.bf16.msra.mxu0 0
    %962 = vmatprep.subr.bf16.mxu0 0
    %963 = vmatpush1.bf16.msra.mxu0 0
    %964 = vmatprep.subr.bf16.mxu0 0
    %965 = vmatpush1.bf16.msra.mxu0 0
    %966 = vmatprep.subr.bf16.mxu0 0
    %967 = vmatpush1.bf16.msra.mxu0 0
    %968 = vmatprep.subr.bf16.mxu0 0
    %969 = vmatpush1.bf16.msra.mxu0 0
    %970 = vmatprep.subr.bf16.mxu0 0
    %971 = vmatpush1.bf16.msra.mxu0 0
    %972 = vmatprep.subr.bf16.mxu0 0
    %973 = vmatpush1.bf16.msra.mxu0 0
    %974 = vmatprep.subr.bf16.mxu0 0
    %975 = vmatpush1.bf16.msra.mxu0 0
    %976 = vmatprep.subr.bf16.mxu0 0
    %977 = vmatpush1.bf16.msra.mxu0 0
    %978 = vmatprep.subr.bf16.mxu0 0
    %979 = vmatpush1.bf16.msra.mxu0 0
    %980 = vmatprep.subr.bf16.mxu0 0
    %981 = vmatpush1.bf16.msra.mxu0 0
    %982 = vmatprep.subr.bf16.mxu0 0
    %983 = vmatpush1.bf16.msra.mxu0 0
    %984 = vmatprep.subr.bf16.mxu0 0
    %985 = vmatpush1.bf16.msra.mxu0 0
    %986 = vmatprep.subr.bf16.mxu0 0
    %987 = vmatpush1.bf16.msra.mxu0 0
    %988 = vmatprep.mubr.bf16.mxu0 0
    %989 = vmatmul.mubr.bf16.gmra.mrb[0].mxu0 %v954
    %v990 = vpop.f32.mrb[0].mxu0
    %v991 = vadd.f32 0.0, %v990
    %v992 = vpop.f32.mrb[0].mxu0
    %v993 = vpop.f32.mrb[0].mxu0
    %v994 = vpop.f32.mrb[0].mxu0
    %995 = vdwg.mxu0
    %v996 = vadd.f32 %v950, %v991
    %v997 = vxor.u32 %v996, 2147483648
    %v998 = vmul.f32 %v997, 1.442695
    %v999 = vpow.pop %v998
    %v1000 = vadd.f32 %v999, 1.0
    %v1001 = vrcp.pop %v1000
    %v1002 = vmul.f32 1.0, %v1001
    %v1003 = vtanh.pop %v996
    %v1004 = vld [vmem:[#allocation4] sm:$0x3]
    %1006 = vrot.lane.b32.xlu0 %v1004, 32
    %v1007 = vpop.permute.xlu0 %1006
    %v1009 = vmul.f32 %v1002, %v1007
    %1011 = vrot.lane.b32.xlu0 %v1003, 64
    %v1012 = vpop.permute.xlu0 %1011
    %v1014 = vmul.f32 %v1002, %v1012
    %1016 = vrot.lane.b32.xlu0 %v1014, 32
    %v1017 = vpop.permute.xlu0 %1016
    %v1019 = vadd.f32 %v1009, %v1017
    %v1020 = vtanh.pop %v1019
    %1022 = vrot.lane.b32.xlu0 %v1020, 64
    %v1023 = vpop.permute.xlu0 %1022
    %v1025 = vmul.f32 %v1002, %v1023
    %1027 = vrot.lane.b32.xlu0 %v1019, 96
    %v1028 = vpop.permute.xlu0 %1027
    %1030 = vst.msk [vmem:[#allocation4] sm:$0x3] %vm601, %v1028
    %1032 = vrot.lane.b32.xlu0 %v1025, 32
    %v1033 = vpop.permute.xlu0 %1032
    %1035 = vst.msk [vmem:[#allocation3] sm:$0x3] %vm601, %v1033
    %v1036 = vpack.c.bf16 %v1025, %v1025
    %v1039 = vunpack.c.l.s4 1966171168
    %v1040 = vunpack.c.0.s8 %v1039
    %v1041 = vlaneseq
    %v1042 = vshrl.u32 %v1041, 7
    %v1043 = vsub.s32 %v1040, %v1042
    %v1044 = vrot.slane %v1036, %v1043
    %v1046 = vunpack.c.l.s4 1966171168
    %v1047 = vunpack.c.0.s8 %v1046
    %v1048 = vlaneseq
    %v1049 = vshrl.u32 %v1048, 7
    %v1050 = vsub.s32 %v1047, %v1049
    %v1051 = vrot.slane %v1044, %v1050
    %1052 = vrot.lane.b32.xlu0 %v1051, 32
    %v1053 = vpop.permute.xlu0 %1052
    %s1055 = scalar_lea.vmem [#allocation16], 4
    %1056 = vst.msk [vmem:[%s1055] sm:$0x1] %vm627, %v1053
    %v1057 = vld [vmem:[%s412] sm:$0x3]
    %v1058 = vld [vmem:[#allocation3] sm:$0x3]
    %v1059 = vpack.c.bf16 %v1058, %v1058
    %v1061 = vsel %vm523, %v1059, 0
    %1063 = vmatprep.subr.bf16.mxu0 0
    %1064 = vmatpush1.bf16.msra.mxu0 %v519
    %1065 = vmatprep.subr.bf16.mxu0 0
    %1066 = vmatpush1.bf16.msra.mxu0 %v520
    %1067 = vmatprep.subr.bf16.mxu0 0
    %1068 = vmatpush1.bf16.msra.mxu0 0
    %1069 = vmatprep.subr.bf16.mxu0 0
    %1070 = vmatpush1.bf16.msra.mxu0 0
    %1071 = vmatprep.subr.bf16.mxu0 0
    %1072 = vmatpush1.bf16.msra.mxu0 0
    %1073 = vmatprep.subr.bf16.mxu0 0
    %1074 = vmatpush1.bf16.msra.mxu0 0
    %1075 = vmatprep.subr.bf16.mxu0 0
    %1076 = vmatpush1.bf16.msra.mxu0 0
    %1077 = vmatprep.subr.bf16.mxu0 0
    %1078 = vmatpush1.bf16.msra.mxu0 0
    %1079 = vmatprep.subr.bf16.mxu0 0
    %1080 = vmatpush1.bf16.msra.mxu0 0
    %1081 = vmatprep.subr.bf16.mxu0 0
    %1082 = vmatpush1.bf16.msra.mxu0 0
    %1083 = vmatprep.subr.bf16.mxu0 0
    %1084 = vmatpush1.bf16.msra.mxu0 0
    %1085 = vmatprep.subr.bf16.mxu0 0
    %1086 = vmatpush1.bf16.msra.mxu0 0
    %1087 = vmatprep.subr.bf16.mxu0 0
    %1088 = vmatpush1.bf16.msra.mxu0 0
    %1089 = vmatprep.subr.bf16.mxu0 0
    %1090 = vmatpush1.bf16.msra.mxu0 0
    %1091 = vmatprep.subr.bf16.mxu0 0
    %1092 = vmatpush1.bf16.msra.mxu0 0
    %1093 = vmatprep.subr.bf16.mxu0 0
    %1094 = vmatpush1.bf16.msra.mxu0 0
    %1095 = vmatprep.mubr.bf16.mxu0 0
    %1096 = vmatmul.mubr.bf16.gmra.mrb[0].mxu0 %v1061
    %v1097 = vpop.f32.mrb[0].mxu0
    %v1098 = vadd.f32 0.0, %v1097
    %v1099 = vpop.f32.mrb[0].mxu0
    %v1100 = vpop.f32.mrb[0].mxu0
    %v1101 = vpop.f32.mrb[0].mxu0
    %1102 = vdwg.mxu0
    %v1103 = vadd.f32 %v1057, %v1098
    %v1104 = vxor.u32 %v1103, 2147483648
    %v1105 = vmul.f32 %v1104, 1.442695
    %v1106 = vpow.pop %v1105
    %v1107 = vadd.f32 %v1106, 1.0
    %v1108 = vrcp.pop %v1107
    %v1109 = vmul.f32 1.0, %v1108
    %v1110 = vtanh.pop %v1103
    %v1111 = vld [vmem:[#allocation4] sm:$0x3]
    %1113 = vrot.lane.b32.xlu0 %v1111, 32
    %v1114 = vpop.permute.xlu0 %1113
    %v1116 = vmul.f32 %v1109, %v1114
    %1118 = vrot.lane.b32.xlu0 %v1110, 64
    %v1119 = vpop.permute.xlu0 %1118
    %v1121 = vmul.f32 %v1109, %v1119
    %1123 = vrot.lane.b32.xlu0 %v1121, 32
    %v1124 = vpop.permute.xlu0 %1123
    %v1126 = vadd.f32 %v1116, %v1124
    %v1127 = vtanh.pop %v1126
    %1129 = vrot.lane.b32.xlu0 %v1127, 64
    %v1130 = vpop.permute.xlu0 %1129
    %v1132 = vmul.f32 %v1109, %v1130
    %1134 = vrot.lane.b32.xlu0 %v1126, 96
    %v1135 = vpop.permute.xlu0 %1134
    %1137 = vst.msk [vmem:[#allocation4] sm:$0x3] %vm601, %v1135
    %1139 = vrot.lane.b32.xlu0 %v1132, 32
    %v1140 = vpop.permute.xlu0 %1139
    %1142 = vst.msk [vmem:[#allocation3] sm:$0x3] %vm601, %v1140
    %v1143 = vpack.c.bf16 %v1132, %v1132
    %v1146 = vunpack.c.l.s4 1966171168
    %v1147 = vunpack.c.0.s8 %v1146
    %v1148 = vlaneseq
    %v1149 = vshrl.u32 %v1148, 7
    %v1150 = vsub.s32 %v1147, %v1149
    %v1151 = vrot.slane %v1143, %v1150
    %v1153 = vunpack.c.l.s4 1966171168
    %v1154 = vunpack.c.0.s8 %v1153
    %v1155 = vlaneseq
    %v1156 = vshrl.u32 %v1155, 7
    %v1157 = vsub.s32 %v1154, %v1156
    %v1158 = vrot.slane %v1151, %v1157
    %1159 = vrot.lane.b32.xlu0 %v1158, 32
    %v1160 = vpop.permute.xlu0 %1159
    %s1162 = scalar_lea.vmem [#allocation16], 5
    %1163 = vst.msk [vmem:[%s1162] sm:$0x1] %vm627, %v1160
    %v1164 = vld [vmem:[%s459] sm:$0x3]
    %v1165 = vld [vmem:[#allocation3] sm:$0x3]
    %v1166 = vpack.c.bf16 %v1165, %v1165
    %v1168 = vsel %vm523, %v1166, 0
    %1170 = vmatprep.subr.bf16.mxu0 0
    %1171 = vmatpush1.bf16.msra.mxu0 %v519
    %1172 = vmatprep.subr.bf16.mxu0 0
    %1173 = vmatpush1.bf16.msra.mxu0 %v520
    %1174 = vmatprep.subr.bf16.mxu0 0
    %1175 = vmatpush1.bf16.msra.mxu0 0
    %1176 = vmatprep.subr.bf16.mxu0 0
    %1177 = vmatpush1.bf16.msra.mxu0 0
    %1178 = vmatprep.subr.bf16.mxu0 0
    %1179 = vmatpush1.bf16.msra.mxu0 0
    %1180 = vmatprep.subr.bf16.mxu0 0
    %1181 = vmatpush1.bf16.msra.mxu0 0
    %1182 = vmatprep.subr.bf16.mxu0 0
    %1183 = vmatpush1.bf16.msra.mxu0 0
    %1184 = vmatprep.subr.bf16.mxu0 0
    %1185 = vmatpush1.bf16.msra.mxu0 0
    %1186 = vmatprep.subr.bf16.mxu0 0
    %1187 = vmatpush1.bf16.msra.mxu0 0
    %1188 = vmatprep.subr.bf16.mxu0 0
    %1189 = vmatpush1.bf16.msra.mxu0 0
    %1190 = vmatprep.subr.bf16.mxu0 0
    %1191 = vmatpush1.bf16.msra.mxu0 0
    %1192 = vmatprep.subr.bf16.mxu0 0
    %1193 = vmatpush1.bf16.msra.mxu0 0
    %1194 = vmatprep.subr.bf16.mxu0 0
    %1195 = vmatpush1.bf16.msra.mxu0 0
    %1196 = vmatprep.subr.bf16.mxu0 0
    %1197 = vmatpush1.bf16.msra.mxu0 0
    %1198 = vmatprep.subr.bf16.mxu0 0
    %1199 = vmatpush1.bf16.msra.mxu0 0
    %1200 = vmatprep.subr.bf16.mxu0 0
    %1201 = vmatpush1.bf16.msra.mxu0 0
    %1202 = vmatprep.mubr.bf16.mxu0 0
    %1203 = vmatmul.mubr.bf16.gmra.mrb[0].mxu0 %v1168
    %v1204 = vpop.f32.mrb[0].mxu0
    %v1205 = vadd.f32 0.0, %v1204
    %v1206 = vpop.f32.mrb[0].mxu0
    %v1207 = vpop.f32.mrb[0].mxu0
    %v1208 = vpop.f32.mrb[0].mxu0
    %1209 = vdwg.mxu0
    %v1210 = vadd.f32 %v1164, %v1205
    %v1211 = vxor.u32 %v1210, 2147483648
    %v1212 = vmul.f32 %v1211, 1.442695
    %v1213 = vpow.pop %v1212
    %v1214 = vadd.f32 %v1213, 1.0
    %v1215 = vrcp.pop %v1214
    %v1216 = vmul.f32 1.0, %v1215
    %v1217 = vtanh.pop %v1210
    %v1218 = vld [vmem:[#allocation4] sm:$0x3]
    %1220 = vrot.lane.b32.xlu0 %v1218, 32
    %v1221 = vpop.permute.xlu0 %1220
    %v1223 = vmul.f32 %v1216, %v1221
    %1225 = vrot.lane.b32.xlu0 %v1217, 64
    %v1226 = vpop.permute.xlu0 %1225
    %v1228 = vmul.f32 %v1216, %v1226
    %1230 = vrot.lane.b32.xlu0 %v1228, 32
    %v1231 = vpop.permute.xlu0 %1230
    %v1233 = vadd.f32 %v1223, %v1231
    %v1234 = vtanh.pop %v1233
    %1236 = vrot.lane.b32.xlu0 %v1234, 64
    %v1237 = vpop.permute.xlu0 %1236
    %v1239 = vmul.f32 %v1216, %v1237
    %1241 = vrot.lane.b32.xlu0 %v1233, 96
    %v1242 = vpop.permute.xlu0 %1241
    %1244 = vst.msk [vmem:[#allocation4] sm:$0x3] %vm601, %v1242
    %1246 = vrot.lane.b32.xlu0 %v1239, 32
    %v1247 = vpop.permute.xlu0 %1246
    %1249 = vst.msk [vmem:[#allocation3] sm:$0x3] %vm601, %v1247
    %v1250 = vpack.c.bf16 %v1239, %v1239
    %v1253 = vunpack.c.l.s4 1966171168
    %v1254 = vunpack.c.0.s8 %v1253
    %v1255 = vlaneseq
    %v1256 = vshrl.u32 %v1255, 7
    %v1257 = vsub.s32 %v1254, %v1256
    %v1258 = vrot.slane %v1250, %v1257
    %v1260 = vunpack.c.l.s4 1966171168
    %v1261 = vunpack.c.0.s8 %v1260
    %v1262 = vlaneseq
    %v1263 = vshrl.u32 %v1262, 7
    %v1264 = vsub.s32 %v1261, %v1263
    %v1265 = vrot.slane %v1258, %v1264
    %1266 = vrot.lane.b32.xlu0 %v1265, 32
    %v1267 = vpop.permute.xlu0 %1266
    %s1269 = scalar_lea.vmem [#allocation16], 6
    %1270 = vst.msk [vmem:[%s1269] sm:$0x1] %vm627, %v1267
    %v1271 = vld [vmem:[%s506] sm:$0x3]
    %v1272 = vld [vmem:[#allocation3] sm:$0x3]
    %v1273 = vpack.c.bf16 %v1272, %v1272
    %v1275 = vsel %vm523, %v1273, 0
    %1277 = vmatprep.subr.bf16.mxu0 0
    %1278 = vmatpush1.bf16.msra.mxu0 %v519
    %1279 = vmatprep.subr.bf16.mxu0 0
    %1280 = vmatpush1.bf16.msra.mxu0 %v520
    %1281 = vmatprep.subr.bf16.mxu0 0
    %1282 = vmatpush1.bf16.msra.mxu0 0
    %1283 = vmatprep.subr.bf16.mxu0 0
    %1284 = vmatpush1.bf16.msra.mxu0 0
    %1285 = vmatprep.subr.bf16.mxu0 0
    %1286 = vmatpush1.bf16.msra.mxu0 0
    %1287 = vmatprep.subr.bf16.mxu0 0
    %1288 = vmatpush1.bf16.msra.mxu0 0
    %1289 = vmatprep.subr.bf16.mxu0 0
    %1290 = vmatpush1.bf16.msra.mxu0 0
    %1291 = vmatprep.subr.bf16.mxu0 0
    %1292 = vmatpush1.bf16.msra.mxu0 0
    %1293 = vmatprep.subr.bf16.mxu0 0
    %1294 = vmatpush1.bf16.msra.mxu0 0
    %1295 = vmatprep.subr.bf16.mxu0 0
    %1296 = vmatpush1.bf16.msra.mxu0 0
    %1297 = vmatprep.subr.bf16.mxu0 0
    %1298 = vmatpush1.bf16.msra.mxu0 0
    %1299 = vmatprep.subr.bf16.mxu0 0
    %1300 = vmatpush1.bf16.msra.mxu0 0
    %1301 = vmatprep.subr.bf16.mxu0 0
    %1302 = vmatpush1.bf16.msra.mxu0 0
    %1303 = vmatprep.subr.bf16.mxu0 0
    %1304 = vmatpush1.bf16.msra.mxu0 0
    %1305 = vmatprep.subr.bf16.mxu0 0
    %1306 = vmatpush1.bf16.msra.mxu0 0
    %1307 = vmatprep.subr.bf16.mxu0 0
    %1308 = vmatpush1.bf16.msra.mxu0 0
    %1309 = vmatprep.mubr.bf16.mxu0 0
    %1310 = vmatmul.mubr.bf16.gmra.mrb[0].mxu0 %v1275
    %v1311 = vpop.f32.mrb[0].mxu0
    %v1312 = vadd.f32 0.0, %v1311
    %v1313 = vpop.f32.mrb[0].mxu0
    %v1314 = vpop.f32.mrb[0].mxu0
    %v1315 = vpop.f32.mrb[0].mxu0
    %1316 = vdwg.mxu0
    %v1317 = vadd.f32 %v1271, %v1312
    %v1318 = vxor.u32 %v1317, 2147483648
    %v1319 = vmul.f32 %v1318, 1.442695
    %v1320 = vpow.pop %v1319
    %v1321 = vadd.f32 %v1320, 1.0
    %v1322 = vrcp.pop %v1321
    %v1323 = vmul.f32 1.0, %v1322
    %v1324 = vtanh.pop %v1317
    %v1325 = vld [vmem:[#allocation4] sm:$0x3]
    %1327 = vrot.lane.b32.xlu0 %v1325, 32
    %v1328 = vpop.permute.xlu0 %1327
    %v1330 = vmul.f32 %v1323, %v1328
    %1332 = vrot.lane.b32.xlu0 %v1324, 64
    %v1333 = vpop.permute.xlu0 %1332
    %v1335 = vmul.f32 %v1323, %v1333
    %1337 = vrot.lane.b32.xlu0 %v1335, 32
    %v1338 = vpop.permute.xlu0 %1337
    %v1340 = vadd.f32 %v1330, %v1338
    %v1341 = vtanh.pop %v1340
    %1343 = vrot.lane.b32.xlu0 %v1341, 64
    %v1344 = vpop.permute.xlu0 %1343
    %v1346 = vmul.f32 %v1323, %v1344
    %1348 = vrot.lane.b32.xlu0 %v1340, 96
    %v1349 = vpop.permute.xlu0 %1348
    %1351 = vst.msk [vmem:[#allocation4] sm:$0x3] %vm601, %v1349
    %1353 = vrot.lane.b32.xlu0 %v1346, 32
    %v1354 = vpop.permute.xlu0 %1353
    %1356 = vst.msk [vmem:[#allocation3] sm:$0x3] %vm601, %v1354
    %v1357 = vpack.c.bf16 %v1346, %v1346
    %v1360 = vunpack.c.l.s4 1966171168
    %v1361 = vunpack.c.0.s8 %v1360
    %v1362 = vlaneseq
    %v1363 = vshrl.u32 %v1362, 7
    %v1364 = vsub.s32 %v1361, %v1363
    %v1365 = vrot.slane %v1357, %v1364
    %v1367 = vunpack.c.l.s4 1966171168
    %v1368 = vunpack.c.0.s8 %v1367
    %v1369 = vlaneseq
    %v1370 = vshrl.u32 %v1369, 7
    %v1371 = vsub.s32 %v1368, %v1370
    %v1372 = vrot.slane %v1365, %v1371
    %1373 = vrot.lane.b32.xlu0 %v1372, 32
    %v1374 = vpop.permute.xlu0 %1373
    %s1376 = scalar_lea.vmem [#allocation16], 7
    %1377 = vst.msk [vmem:[%s1376] sm:$0x1] %vm627, %v1374
    // Predicated region
    $region54: #{tpu_custom_call.1} parent=1 // pred_check
      %p1378 = pneg %p105
    $region55: #{tpu_custom_call.1} parent=1 // pred_check_branch
      %1380 = sbr.rel (%p1378) target = $region57
    $region56: #{tpu_custom_call.1} parent=1 // pred_region
      %v1381 = vld [vmem:[#allocation3] sm:$0x3]
      %1382 = vst.msk [vmem:[#allocation17] sm:$0x3] %vm601, %v1381
      %v1383 = vld [vmem:[#allocation4] sm:$0x3]
      %1384 = vst.msk [vmem:[#allocation19] sm:$0x3] %vm601, %v1383
    $region57: #{tpu_custom_call.1} parent=1 // pred_fallthru
      _
    // Predicated region
    $region58: #{tpu_custom_call.1} parent=1 // pred_check
      _
    $region59: #{tpu_custom_call.1} parent=1 // pred_check_branch
      %1386 = sbr.rel (0) target = $region61
    $region60: #{tpu_custom_call.1} parent=1 // pred_region
      %s1388 = ssub.s32 128, 128
      %1389 = vsyncadd [#allocation7], %s1388
      %s1390 = sshll.u32 [#allocation16], 4
      %s1391 = int_to_ptr.vmem [resolvable:$true] %s1390
      %1396 = dma.vmem_to_hbm [thread:$0]  %s1391, 128, %s6, [#allocation7], 16, 16, 1
    $region61: #{tpu_custom_call.1} parent=1 // pred_fallthru
      _
    // Predicated region
    $region62: #{tpu_custom_call.1} parent=1 // pred_check
      _
    $region63: #{tpu_custom_call.1} parent=1 // pred_check_branch
      %1398 = sbr.rel (0) target = $region65
    $region64: #{tpu_custom_call.1} parent=1 // pred_region
      %s1400 = ssub.s32 32, 32
      %1401 = vsyncadd [#allocation18], %s1400
      %s1403 = sshll.u32 [#allocation17], 4
      %s1404 = int_to_ptr.vmem [resolvable:$true] %s1403
      %1406 = dma.vmem_to_hbm [thread:$0]  %s1404, 32, %s7, [#allocation18]
    $region65: #{tpu_custom_call.1} parent=1 // pred_fallthru
      _
    // Predicated region
    $region66: #{tpu_custom_call.1} parent=1 // pred_check
      _
    $region67: #{tpu_custom_call.1} parent=1 // pred_check_branch
      %1408 = sbr.rel (0) target = $region69
    $region68: #{tpu_custom_call.1} parent=1 // pred_region
      %s1410 = ssub.s32 32, 32
      %1411 = vsyncadd [#allocation18], %s1410
      %s1413 = sshll.u32 [#allocation19], 4
      %s1414 = int_to_ptr.vmem [resolvable:$true] %s1413
      %1416 = dma.vmem_to_hbm [thread:$0]  %s1414, 32, %s8, [#allocation18]
    $region69: #{tpu_custom_call.1} parent=1 // pred_fallthru
      _
    // Predicated region
    $region70: #{tpu_custom_call.1} parent=1 // pred_check
      _
    $region71: #{tpu_custom_call.1} parent=1 // pred_check_branch
      %1418 = sbr.rel (0) target = $region73
    $region72: #{tpu_custom_call.1} parent=1 // pred_region
      %1419 = dma.done [#allocation7], 128
    $region73: #{tpu_custom_call.1} parent=1 // pred_fallthru
      _
    // Predicated region
    $region74: #{tpu_custom_call.1} parent=1 // pred_check
      _
    $region75: #{tpu_custom_call.1} parent=1 // pred_check_branch
      %1421 = sbr.rel (0) target = $region77
    $region76: #{tpu_custom_call.1} parent=1 // pred_region
      %1422 = dma.done [#allocation18], 32
    $region77: #{tpu_custom_call.1} parent=1 // pred_fallthru
      _
    // Predicated region
    $region78: #{tpu_custom_call.1} parent=1 // pred_check
      _
    $region79: #{tpu_custom_call.1} parent=1 // pred_check_branch
      %1424 = sbr.rel (0) target = $region81
    $region80: #{tpu_custom_call.1} parent=1 // pred_region
      %1425 = dma.done [#allocation18], 32
    $region81: #{tpu_custom_call.1} parent=1 // pred_fallthru
      _
    %1426 = vsyncpa [#allocation6], 1
    %1427 = vsyncpa [#allocation9], 1
    %1428 = vsyncpa [#allocation12], 1
    %1429 = vsyncpa [#allocation15], 1
    %1430 = vsyncpa [#allocation7], 1
    %1431 = vsyncpa [#allocation18], 1

</llo_original>
